<compile_context>
chip_gen: v7x
topology: tpu7x:2x2x1
jax: 0.10.0
libtpu: 0.0.40
codegen_flags: <defaults>
</compile_context>

<pallas_src>
import functools

import jax
import jax.numpy as jnp
from jax.experimental import pallas as pl
from jax.experimental.pallas import tpu as pltpu

_LANE = 128
_SUBLANE = 8


def _round_up(x, m):
    return (x + m - 1) // m * m


# ----------------------------------------------------------------------------
# Kernel 1: fold embedding + W_c (+ bias) into one (vocab_pad, D_pad) table.
#           Tiled over the vocab axis so the embedding table is streamed
#           through VMEM instead of staged whole (v5e/v7x VMEM budgets).
# ----------------------------------------------------------------------------
def _fold_table_kernel(emb_ref, wct_ref, bc_ref, table_ref, *, vocab_size):
    tile_v = emb_ref.shape[0]
    v0 = pl.program_id(0) * tile_v
    emb = emb_ref[...].astype(jnp.bfloat16)            # (tile_v, E_pad)
    wct = wct_ref[...].astype(jnp.bfloat16)            # (E_pad, D_pad)
    t = jnp.dot(emb, wct, preferred_element_type=jnp.float32) + bc_ref[...]
    rows = v0 + jax.lax.broadcasted_iota(jnp.int32, t.shape, 0)
    # Rows >= vocab_size are the padding-sentinel rows and must be exactly zero
    # (they model batch_node's untouched zero rows in the reference).
    table_ref[...] = jnp.where(rows < vocab_size, t, 0.0)


def fold_table(emb_p, wct_p, bc_p, *, vocab_size, tile_v=_SUBLANE):
    vp, ep = emb_p.shape
    dp = wct_p.shape[1]
    kern = functools.partial(_fold_table_kernel, vocab_size=vocab_size)
    return pl.pallas_call(
        kern,
        out_shape=jax.ShapeDtypeStruct((vp, dp), jnp.float32),
        grid=(vp // tile_v,),
        in_specs=[
            pl.BlockSpec((tile_v, ep), lambda i: (i, 0)),
            pl.BlockSpec((ep, dp), lambda i: (0, 0)),
            pl.BlockSpec((1, dp), lambda i: (0, 0)),
        ],
        out_specs=pl.BlockSpec((tile_v, dp), lambda i: (i, 0)),
        compiler_params=pltpu.CompilerParams(dimension_semantics=("parallel",)),
    )(emb_p, wct_p, bc_p)


# ----------------------------------------------------------------------------
# Kernel 2: HBM row gather (async DMA per node token, all issued up front so
#           their latencies overlap) + fused node-axis max pooling.
#           Single grid step; token ids live in SMEM; table stays in HBM.
# ----------------------------------------------------------------------------
def _gather_max_kernel(ids_ref, table_hbm, out_ref, buf, sems, *, batch, seq):
    nrows = batch * seq
    # Issue every row-gather DMA back to back so they are all in flight at once.
    for b in range(batch):
        for t in range(seq):
            i = b * seq + t
            tok = ids_ref[b, t]                         # scalar read from SMEM
            pltpu.make_async_copy(
                table_hbm.at[pl.ds(tok, 1)], buf.at[pl.ds(i, 1)], sems.at[i]
            ).start()
    for i in range(nrows):
        pltpu.make_async_copy(
            table_hbm.at[pl.ds(0, 1)], buf.at[pl.ds(i, 1)], sems.at[i]
        ).wait()
    rows = buf[...]                                     # (B*T, D_pad)
    rows = rows.reshape(batch, seq, rows.shape[-1])     # (B, T, D_pad)
    out_ref[...] = jnp.max(rows, axis=1)                # fused max-pool, lane-dense


def gather_max(ids, table):
    b, t = ids.shape
    _, dp = table.shape
    kern = functools.partial(_gather_max_kernel, batch=b, seq=t)
    return pl.pallas_call(
        kern,
        out_shape=jax.ShapeDtypeStruct((b, dp), jnp.float32),
        in_specs=[
            pl.BlockSpec(memory_space=pltpu.MemorySpace.SMEM),  # node token ids
            pl.BlockSpec(memory_space=pl.ANY),                  # folded table in HBM
        ],
        out_specs=pl.BlockSpec(memory_space=pltpu.MemorySpace.VMEM),
        scratch_shapes=[
            pltpu.VMEM((b * t, dp), jnp.float32),
            pltpu.SemaphoreType.DMA((b * t,)),
        ],
    )(ids, table)


# ----------------------------------------------------------------------------
# Model glue
# ----------------------------------------------------------------------------
def init_params(key, vocab_size, embedding_dim, encode_dim):
    k_emb, k_w, k_b = jax.random.split(key, 3)
    s = 0.1
    return {
        "emb": jax.random.normal(k_emb, (vocab_size, embedding_dim), jnp.float32) * s,
        # W_c stored transposed (E, D) so the fold is a plain x @ W matmul.
        "wc_t": jax.random.normal(k_w, (embedding_dim, encode_dim), jnp.float32) * s,
        "bc": jax.random.normal(k_b, (1, encode_dim), jnp.float32) * s,
    }


@jax.jit
def batch_tree_encoder_forward(params, tokens):
    """tokens: (batch, max_nodes) int32; -1 (or >= vocab) marks an absent node.

    Returns (batch, encode_dim): elementwise max over the node axis of
    W_c(embedding(token)), with absent slots contributing zero rows — the
    leaf/flattened-node semantics of BatchTreeEncoder.forward.
    """
    emb, wc_t, bc = params["emb"], params["wc_t"], params["bc"]
    v, e = emb.shape
    d = wc_t.shape[1]

    ep = _round_up(e, _LANE)
    dp = _round_up(d, _LANE)
    vp = _round_up(v + 1, _SUBLANE)   # +1 all-zero sentinel row for absent nodes

    emb_p = jnp.zeros((vp, ep), jnp.float32).at[:v, :e].set(emb)
    wct_p = jnp.zeros((ep, dp), jnp.float32).at[:e, :d].set(wc_t)
    bc_p = jnp.zeros((1, dp), jnp.float32).at[:, :d].set(bc)

    table = fold_table(emb_p, wct_p, bc_p, vocab_size=v)          # (vp, dp)

    ids = jnp.where((tokens >= 0) & (tokens < v), tokens, v).astype(jnp.int32)
    pooled = gather_max(ids, table)                                # (batch, dp)
    return pooled[:, :d]


if __name__ == "__main__":
    BATCH = 2
    MAX_NODES = 8
    VOCAB = 32
    EMBED_DIM = 16
    ENCODE_DIM = 16

    key = jax.random.PRNGKey(0)
    k_params, k_tok = jax.random.split(key, 2)
    params = init_params(k_params, VOCAB, EMBED_DIM, ENCODE_DIM)

    tokens = jax.random.randint(k_tok, (BATCH, MAX_NODES), 0, VOCAB, dtype=jnp.int32)
    tokens = tokens.at[0, MAX_NODES - 1].set(-1)   # one absent node slot

    out = jax.block_until_ready(batch_tree_encoder_forward(params, tokens))

    # Pure-JAX reference for the same (leaf/flattened-node) semantics.
    valid = (tokens >= 0) & (tokens < VOCAB)
    safe = jnp.where(valid, tokens, 0)
    enc = params["emb"][safe] @ params["wc_t"] + params["bc"]      # (B, T, D)
    enc = jnp.where(valid[..., None], enc, 0.0)
    ref = jnp.max(enc, axis=1)

    assert out.shape == (BATCH, ENCODE_DIM)
    assert bool(jnp.all(jnp.isfinite(out)))
    assert jnp.allclose(out, ref, atol=1e-2, rtol=1e-1), (out, ref)
    print("KERNEL_OK")
</pallas_src>

<mosaic_0001>
module attributes {stable_mosaic.version = 11 : i64} {
  func.func @_fold_table_kernel(%arg0: i32, %arg1: memref<8x128xf32, #tpu.memory_space<vmem>>, %arg2: memref<128x128xf32, #tpu.memory_space<vmem>>, %arg3: memref<1x128xf32, #tpu.memory_space<vmem>>, %arg4: memref<8x128xf32, #tpu.memory_space<vmem>>) attributes {dimension_semantics = [#tpu.dimension_semantics<parallel>], iteration_bounds = array<i64: 5>, scalar_prefetch = 0 : i64, scratch_operands = 0 : i64, tpu.core_type = #tpu.core_type<tc>, window_params = [{transform_indices = @transform_0, window_bounds = array<i64: 8, 128>}, {pipeline_mode = #tpu.pipeline_mode<synchronous>, transform_indices = @transform_1, window_bounds = array<i64: 128, 128>}, {pipeline_mode = #tpu.pipeline_mode<synchronous>, transform_indices = @transform_2, window_bounds = array<i64: 1, 128>}, {transform_indices = @transform_3, window_bounds = array<i64: 8, 128>}]} {
    %c8_i32 = arith.constant 8 : i32
    %0 = arith.muli %arg0, %c8_i32 : i32
    %c0 = arith.constant 0 : index
    %c0_0 = arith.constant 0 : index
    %1 = vector.load %arg1[%c0, %c0_0] : memref<8x128xf32, #tpu.memory_space<vmem>>, vector<8x128xf32>
    %2 = arith.truncf %1 : vector<8x128xf32> to vector<8x128xbf16>
    %c0_1 = arith.constant 0 : index
    %c0_2 = arith.constant 0 : index
    %3 = vector.load %arg2[%c0_1, %c0_2] : memref<128x128xf32, #tpu.memory_space<vmem>>, vector<128x128xf32>
    %4 = arith.truncf %3 : vector<128x128xf32> to vector<128x128xbf16>
    %cst = arith.constant dense<0.000000e+00> : vector<8x128xf32>
    %5 = tpu.matmul %2, %4, %cst {dimension_numbers = #tpu.dot_dimension_numbers<[1], [0], [0], [1], [0, 0, 1, 1], [], []>} : vector<8x128xbf16>, vector<128x128xbf16>, vector<8x128xf32> -> vector<8x128xf32>
    %c0_3 = arith.constant 0 : index
    %c0_4 = arith.constant 0 : index
    %6 = vector.load %arg3[%c0_3, %c0_4] : memref<1x128xf32, #tpu.memory_space<vmem>>, vector<1x128xf32>
    %7 = vector.broadcast %6 : vector<1x128xf32> to vector<8x128xf32>
    %8 = arith.addf %5, %7 : vector<8x128xf32>
    %9 = tpu.iota {dimensions = array<i32: 0>} : vector<8x128xi32>
    %10 = vector.broadcast %0 : i32 to vector<8x128xi32>
    %11 = arith.addi %10, %9 : vector<8x128xi32>
    %c32_i32 = arith.constant 32 : i32
    %12 = vector.broadcast %c32_i32 : i32 to vector<8x128xi32>
    %13 = arith.cmpi slt, %11, %12 : vector<8x128xi32>
    %cst_5 = arith.constant 0.000000e+00 : f32
    %14 = vector.broadcast %cst_5 : f32 to vector<8x128xf32>
    %15 = arith.select %13, %8, %14 : vector<8x128xi1>, vector<8x128xf32>
    %c0_6 = arith.constant 0 : index
    %c0_7 = arith.constant 0 : index
    %16 = vector.load %arg4[%c0_6, %c0_7] : memref<8x128xf32, #tpu.memory_space<vmem>>, vector<8x128xf32>
    tpu.vector_store %arg4[%c0_6, %c0_7], %15 {strides = array<i32>} : memref<8x128xf32, #tpu.memory_space<vmem>>, vector<8x128xf32>,
    return
  }
  func.func @transform_0(%arg0: i32) -> (i32, i32) {
    %c0_i32 = arith.constant 0 : i32
    %c0_i32_0 = arith.constant 0 : i32
    return %arg0, %c0_i32 : i32, i32
  }
  func.func @transform_1(%arg0: i32) -> (i32, i32) {
    %c0_i32 = arith.constant 0 : i32
    %c0_i32_0 = arith.constant 0 : i32
    %c0_i32_1 = arith.constant 0 : i32
    return %c0_i32, %c0_i32_0 : i32, i32
  }
  func.func @transform_2(%arg0: i32) -> (i32, i32) {
    %c0_i32 = arith.constant 0 : i32
    %c0_i32_0 = arith.constant 0 : i32
    %c0_i32_1 = arith.constant 0 : i32
    return %c0_i32, %c0_i32_0 : i32, i32
  }
  func.func @transform_3(%arg0: i32) -> (i32, i32) {
    %c0_i32 = arith.constant 0 : i32
    %c0_i32_0 = arith.constant 0 : i32
    return %arg0, %c0_i32 : i32, i32
  }
}

module attributes {stable_mosaic.version = 11 : i64} {
  func.func @_gather_max_kernel(%arg0: memref<2x8xi32, #tpu.memory_space<smem>>, %arg1: memref<40x128xf32, #tpu.memory_space<any>>, %arg2: memref<2x128xf32, #tpu.memory_space<vmem>>, %arg3: memref<16x128xf32, #tpu.memory_space<vmem>>, %arg4: memref<16x!tpu.dma_semaphore, #tpu.memory_space<semaphore_mem>>) attributes {dimension_semantics = [], scalar_prefetch = 0 : i64, scratch_operands = 2 : i64, tpu.core_type = #tpu.core_type<tc>} {
    %c0 = arith.constant 0 : index
    %c0_0 = arith.constant 0 : index
    %0 = memref.load %arg0[%c0, %c0_0] : memref<2x8xi32, #tpu.memory_space<smem>>
    %c0_i32 = arith.constant 0 : i32
    %c0_i32_1 = arith.constant 0 : i32
    %1 = tpu.memref_slice %arg1[%0, %c0_i32_1] : memref<40x128xf32, #tpu.memory_space<any>> -> memref<1x128xf32, #tpu.memory_space<any>>
    %c0_i32_2 = arith.constant 0 : i32
    %c0_i32_3 = arith.constant 0 : i32
    %2 = tpu.memref_slice %arg3[%c0_i32_2, %c0_i32_3] : memref<16x128xf32, #tpu.memory_space<vmem>> -> memref<1x128xf32, #tpu.memory_space<vmem>>
    %3 = tpu.memref_slice %arg4[%c0_i32] : memref<16x!tpu.dma_semaphore, #tpu.memory_space<semaphore_mem>> -> memref<1x!tpu.dma_semaphore, #tpu.memory_space<semaphore_mem>>
    %4 = tpu.memref_squeeze %3 : memref<1x!tpu.dma_semaphore, #tpu.memory_space<semaphore_mem>> -> memref<!tpu.dma_semaphore, #tpu.memory_space<semaphore_mem>>
    tpu.enqueue_dma source(%1 : memref<1x128xf32, #tpu.memory_space<any>>) target(%2 : memref<1x128xf32, #tpu.memory_space<vmem>>) target_semaphore(%4 : memref<!tpu.dma_semaphore, #tpu.memory_space<semaphore_mem>>)
    %c0_4 = arith.constant 0 : index
    %c1 = arith.constant 1 : index
    %5 = memref.load %arg0[%c0_4, %c1] : memref<2x8xi32, #tpu.memory_space<smem>>
    %c1_i32 = arith.constant 1 : i32
    %c0_i32_5 = arith.constant 0 : i32
    %6 = tpu.memref_slice %arg1[%5, %c0_i32_5] : memref<40x128xf32, #tpu.memory_space<any>> -> memref<1x128xf32, #tpu.memory_space<any>>
    %c1_i32_6 = arith.constant 1 : i32
    %c0_i32_7 = arith.constant 0 : i32
    %7 = tpu.memref_slice %arg3[%c1_i32_6, %c0_i32_7] : memref<16x128xf32, #tpu.memory_space<vmem>> -> memref<1x128xf32, #tpu.memory_space<vmem>>
    %8 = tpu.memref_slice %arg4[%c1_i32] : memref<16x!tpu.dma_semaphore, #tpu.memory_space<semaphore_mem>> -> memref<1x!tpu.dma_semaphore, #tpu.memory_space<semaphore_mem>>
    %9 = tpu.memref_squeeze %8 : memref<1x!tpu.dma_semaphore, #tpu.memory_space<semaphore_mem>> -> memref<!tpu.dma_semaphore, #tpu.memory_space<semaphore_mem>>
    tpu.enqueue_dma source(%6 : memref<1x128xf32, #tpu.memory_space<any>>) target(%7 : memref<1x128xf32, #tpu.memory_space<vmem>>) target_semaphore(%9 : memref<!tpu.dma_semaphore, #tpu.memory_space<semaphore_mem>>)
    %c0_8 = arith.constant 0 : index
    %c2 = arith.constant 2 : index
    %10 = memref.load %arg0[%c0_8, %c2] : memref<2x8xi32, #tpu.memory_space<smem>>
    %c2_i32 = arith.constant 2 : i32
    %c0_i32_9 = arith.constant 0 : i32
    %11 = tpu.memref_slice %arg1[%10, %c0_i32_9] : memref<40x128xf32, #tpu.memory_space<any>> -> memref<1x128xf32, #tpu.memory_space<any>>
    %c2_i32_10 = arith.constant 2 : i32
    %c0_i32_11 = arith.constant 0 : i32
    %12 = tpu.memref_slice %arg3[%c2_i32_10, %c0_i32_11] : memref<16x128xf32, #tpu.memory_space<vmem>> -> memref<1x128xf32, #tpu.memory_space<vmem>>
    %13 = tpu.memref_slice %arg4[%c2_i32] : memref<16x!tpu.dma_semaphore, #tpu.memory_space<semaphore_mem>> -> memref<1x!tpu.dma_semaphore, #tpu.memory_space<semaphore_mem>>
    %14 = tpu.memref_squeeze %13 : memref<1x!tpu.dma_semaphore, #tpu.memory_space<semaphore_mem>> -> memref<!tpu.dma_semaphore, #tpu.memory_space<semaphore_mem>>
    tpu.enqueue_dma source(%11 : memref<1x128xf32, #tpu.memory_space<any>>) target(%12 : memref<1x128xf32, #tpu.memory_space<vmem>>) target_semaphore(%14 : memref<!tpu.dma_semaphore, #tpu.memory_space<semaphore_mem>>)
    %c0_12 = arith.constant 0 : index
    %c3 = arith.constant 3 : index
    %15 = memref.load %arg0[%c0_12, %c3] : memref<2x8xi32, #tpu.memory_space<smem>>
    %c3_i32 = arith.constant 3 : i32
    %c0_i32_13 = arith.constant 0 : i32
    %16 = tpu.memref_slice %arg1[%15, %c0_i32_13] : memref<40x128xf32, #tpu.memory_space<any>> -> memref<1x128xf32, #tpu.memory_space<any>>
    %c3_i32_14 = arith.constant 3 : i32
    %c0_i32_15 = arith.constant 0 : i32
    %17 = tpu.memref_slice %arg3[%c3_i32_14, %c0_i32_15] : memref<16x128xf32, #tpu.memory_space<vmem>> -> memref<1x128xf32, #tpu.memory_space<vmem>>
    %18 = tpu.memref_slice %arg4[%c3_i32] : memref<16x!tpu.dma_semaphore, #tpu.memory_space<semaphore_mem>> -> memref<1x!tpu.dma_semaphore, #tpu.memory_space<semaphore_mem>>
    %19 = tpu.memref_squeeze %18 : memref<1x!tpu.dma_semaphore, #tpu.memory_space<semaphore_mem>> -> memref<!tpu.dma_semaphore, #tpu.memory_space<semaphore_mem>>
    tpu.enqueue_dma source(%16 : memref<1x128xf32, #tpu.memory_space<any>>) target(%17 : memref<1x128xf32, #tpu.memory_space<vmem>>) target_semaphore(%19 : memref<!tpu.dma_semaphore, #tpu.memory_space<semaphore_mem>>)
    %c0_16 = arith.constant 0 : index
    %c4 = arith.constant 4 : index
    %20 = memref.load %arg0[%c0_16, %c4] : memref<2x8xi32, #tpu.memory_space<smem>>
    %c4_i32 = arith.constant 4 : i32
    %c0_i32_17 = arith.constant 0 : i32
    %21 = tpu.memref_slice %arg1[%20, %c0_i32_17] : memref<40x128xf32, #tpu.memory_space<any>> -> memref<1x128xf32, #tpu.memory_space<any>>
    %c4_i32_18 = arith.constant 4 : i32
    %c0_i32_19 = arith.constant 0 : i32
    %22 = tpu.memref_slice %arg3[%c4_i32_18, %c0_i32_19] : memref<16x128xf32, #tpu.memory_space<vmem>> -> memref<1x128xf32, #tpu.memory_space<vmem>>
    %23 = tpu.memref_slice %arg4[%c4_i32] : memref<16x!tpu.dma_semaphore, #tpu.memory_space<semaphore_mem>> -> memref<1x!tpu.dma_semaphore, #tpu.memory_space<semaphore_mem>>
    %24 = tpu.memref_squeeze %23 : memref<1x!tpu.dma_semaphore, #tpu.memory_space<semaphore_mem>> -> memref<!tpu.dma_semaphore, #tpu.memory_space<semaphore_mem>>
    tpu.enqueue_dma source(%21 : memref<1x128xf32, #tpu.memory_space<any>>) target(%22 : memref<1x128xf32, #tpu.memory_space<vmem>>) target_semaphore(%24 : memref<!tpu.dma_semaphore, #tpu.memory_space<semaphore_mem>>)
    %c0_20 = arith.constant 0 : index
    %c5 = arith.constant 5 : index
    %25 = memref.load %arg0[%c0_20, %c5] : memref<2x8xi32, #tpu.memory_space<smem>>
    %c5_i32 = arith.constant 5 : i32
    %c0_i32_21 = arith.constant 0 : i32
    %26 = tpu.memref_slice %arg1[%25, %c0_i32_21] : memref<40x128xf32, #tpu.memory_space<any>> -> memref<1x128xf32, #tpu.memory_space<any>>
    %c5_i32_22 = arith.constant 5 : i32
    %c0_i32_23 = arith.constant 0 : i32
    %27 = tpu.memref_slice %arg3[%c5_i32_22, %c0_i32_23] : memref<16x128xf32, #tpu.memory_space<vmem>> -> memref<1x128xf32, #tpu.memory_space<vmem>>
    %28 = tpu.memref_slice %arg4[%c5_i32] : memref<16x!tpu.dma_semaphore, #tpu.memory_space<semaphore_mem>> -> memref<1x!tpu.dma_semaphore, #tpu.memory_space<semaphore_mem>>
    %29 = tpu.memref_squeeze %28 : memref<1x!tpu.dma_semaphore, #tpu.memory_space<semaphore_mem>> -> memref<!tpu.dma_semaphore, #tpu.memory_space<semaphore_mem>>
    tpu.enqueue_dma source(%26 : memref<1x128xf32, #tpu.memory_space<any>>) target(%27 : memref<1x128xf32, #tpu.memory_space<vmem>>) target_semaphore(%29 : memref<!tpu.dma_semaphore, #tpu.memory_space<semaphore_mem>>)
    %c0_24 = arith.constant 0 : index
    %c6 = arith.constant 6 : index
    %30 = memref.load %arg0[%c0_24, %c6] : memref<2x8xi32, #tpu.memory_space<smem>>
    %c6_i32 = arith.constant 6 : i32
    %c0_i32_25 = arith.constant 0 : i32
    %31 = tpu.memref_slice %arg1[%30, %c0_i32_25] : memref<40x128xf32, #tpu.memory_space<any>> -> memref<1x128xf32, #tpu.memory_space<any>>
    %c6_i32_26 = arith.constant 6 : i32
    %c0_i32_27 = arith.constant 0 : i32
    %32 = tpu.memref_slice %arg3[%c6_i32_26, %c0_i32_27] : memref<16x128xf32, #tpu.memory_space<vmem>> -> memref<1x128xf32, #tpu.memory_space<vmem>>
    %33 = tpu.memref_slice %arg4[%c6_i32] : memref<16x!tpu.dma_semaphore, #tpu.memory_space<semaphore_mem>> -> memref<1x!tpu.dma_semaphore, #tpu.memory_space<semaphore_mem>>
    %34 = tpu.memref_squeeze %33 : memref<1x!tpu.dma_semaphore, #tpu.memory_space<semaphore_mem>> -> memref<!tpu.dma_semaphore, #tpu.memory_space<semaphore_mem>>
    tpu.enqueue_dma source(%31 : memref<1x128xf32, #tpu.memory_space<any>>) target(%32 : memref<1x128xf32, #tpu.memory_space<vmem>>) target_semaphore(%34 : memref<!tpu.dma_semaphore, #tpu.memory_space<semaphore_mem>>)
    %c0_28 = arith.constant 0 : index
    %c7 = arith.constant 7 : index
    %35 = memref.load %arg0[%c0_28, %c7] : memref<2x8xi32, #tpu.memory_space<smem>>
    %c7_i32 = arith.constant 7 : i32
    %c0_i32_29 = arith.constant 0 : i32
    %36 = tpu.memref_slice %arg1[%35, %c0_i32_29] : memref<40x128xf32, #tpu.memory_space<any>> -> memref<1x128xf32, #tpu.memory_space<any>>
    %c7_i32_30 = arith.constant 7 : i32
    %c0_i32_31 = arith.constant 0 : i32
    %37 = tpu.memref_slice %arg3[%c7_i32_30, %c0_i32_31] : memref<16x128xf32, #tpu.memory_space<vmem>> -> memref<1x128xf32, #tpu.memory_space<vmem>>
    %38 = tpu.memref_slice %arg4[%c7_i32] : memref<16x!tpu.dma_semaphore, #tpu.memory_space<semaphore_mem>> -> memref<1x!tpu.dma_semaphore, #tpu.memory_space<semaphore_mem>>
    %39 = tpu.memref_squeeze %38 : memref<1x!tpu.dma_semaphore, #tpu.memory_space<semaphore_mem>> -> memref<!tpu.dma_semaphore, #tpu.memory_space<semaphore_mem>>
    tpu.enqueue_dma source(%36 : memref<1x128xf32, #tpu.memory_space<any>>) target(%37 : memref<1x128xf32, #tpu.memory_space<vmem>>) target_semaphore(%39 : memref<!tpu.dma_semaphore, #tpu.memory_space<semaphore_mem>>)
    %c1_32 = arith.constant 1 : index
    %c0_33 = arith.constant 0 : index
    %40 = memref.load %arg0[%c1_32, %c0_33] : memref<2x8xi32, #tpu.memory_space<smem>>
    %c8_i32 = arith.constant 8 : i32
    %c0_i32_34 = arith.constant 0 : i32
    %41 = tpu.memref_slice %arg1[%40, %c0_i32_34] : memref<40x128xf32, #tpu.memory_space<any>> -> memref<1x128xf32, #tpu.memory_space<any>>
    %c8_i32_35 = arith.constant 8 : i32
    %c0_i32_36 = arith.constant 0 : i32
    %42 = tpu.memref_slice %arg3[%c8_i32_35, %c0_i32_36] : memref<16x128xf32, #tpu.memory_space<vmem>> -> memref<1x128xf32, #tpu.memory_space<vmem>>
    %43 = tpu.memref_slice %arg4[%c8_i32] : memref<16x!tpu.dma_semaphore, #tpu.memory_space<semaphore_mem>> -> memref<1x!tpu.dma_semaphore, #tpu.memory_space<semaphore_mem>>
    %44 = tpu.memref_squeeze %43 : memref<1x!tpu.dma_semaphore, #tpu.memory_space<semaphore_mem>> -> memref<!tpu.dma_semaphore, #tpu.memory_space<semaphore_mem>>
    tpu.enqueue_dma source(%41 : memref<1x128xf32, #tpu.memory_space<any>>) target(%42 : memref<1x128xf32, #tpu.memory_space<vmem>>) target_semaphore(%44 : memref<!tpu.dma_semaphore, #tpu.memory_space<semaphore_mem>>)
    %c1_37 = arith.constant 1 : index
    %c1_38 = arith.constant 1 : index
    %45 = memref.load %arg0[%c1_37, %c1_38] : memref<2x8xi32, #tpu.memory_space<smem>>
    %c9_i32 = arith.constant 9 : i32
    %c0_i32_39 = arith.constant 0 : i32
    %46 = tpu.memref_slice %arg1[%45, %c0_i32_39] : memref<40x128xf32, #tpu.memory_space<any>> -> memref<1x128xf32, #tpu.memory_space<any>>
    %c9_i32_40 = arith.constant 9 : i32
    %c0_i32_41 = arith.constant 0 : i32
    %47 = tpu.memref_slice %arg3[%c9_i32_40, %c0_i32_41] : memref<16x128xf32, #tpu.memory_space<vmem>> -> memref<1x128xf32, #tpu.memory_space<vmem>>
    %48 = tpu.memref_slice %arg4[%c9_i32] : memref<16x!tpu.dma_semaphore, #tpu.memory_space<semaphore_mem>> -> memref<1x!tpu.dma_semaphore, #tpu.memory_space<semaphore_mem>>
    %49 = tpu.memref_squeeze %48 : memref<1x!tpu.dma_semaphore, #tpu.memory_space<semaphore_mem>> -> memref<!tpu.dma_semaphore, #tpu.memory_space<semaphore_mem>>
    tpu.enqueue_dma source(%46 : memref<1x128xf32, #tpu.memory_space<any>>) target(%47 : memref<1x128xf32, #tpu.memory_space<vmem>>) target_semaphore(%49 : memref<!tpu.dma_semaphore, #tpu.memory_space<semaphore_mem>>)
    %c1_42 = arith.constant 1 : index
    %c2_43 = arith.constant 2 : index
    %50 = memref.load %arg0[%c1_42, %c2_43] : memref<2x8xi32, #tpu.memory_space<smem>>
    %c10_i32 = arith.constant 10 : i32
    %c0_i32_44 = arith.constant 0 : i32
    %51 = tpu.memref_slice %arg1[%50, %c0_i32_44] : memref<40x128xf32, #tpu.memory_space<any>> -> memref<1x128xf32, #tpu.memory_space<any>>
    %c10_i32_45 = arith.constant 10 : i32
    %c0_i32_46 = arith.constant 0 : i32
    %52 = tpu.memref_slice %arg3[%c10_i32_45, %c0_i32_46] : memref<16x128xf32, #tpu.memory_space<vmem>> -> memref<1x128xf32, #tpu.memory_space<vmem>>
    %53 = tpu.memref_slice %arg4[%c10_i32] : memref<16x!tpu.dma_semaphore, #tpu.memory_space<semaphore_mem>> -> memref<1x!tpu.dma_semaphore, #tpu.memory_space<semaphore_mem>>
    %54 = tpu.memref_squeeze %53 : memref<1x!tpu.dma_semaphore, #tpu.memory_space<semaphore_mem>> -> memref<!tpu.dma_semaphore, #tpu.memory_space<semaphore_mem>>
    tpu.enqueue_dma source(%51 : memref<1x128xf32, #tpu.memory_space<any>>) target(%52 : memref<1x128xf32, #tpu.memory_space<vmem>>) target_semaphore(%54 : memref<!tpu.dma_semaphore, #tpu.memory_space<semaphore_mem>>)
    %c1_47 = arith.constant 1 : index
    %c3_48 = arith.constant 3 : index
    %55 = memref.load %arg0[%c1_47, %c3_48] : memref<2x8xi32, #tpu.memory_space<smem>>
    %c11_i32 = arith.constant 11 : i32
    %c0_i32_49 = arith.constant 0 : i32
    %56 = tpu.memref_slice %arg1[%55, %c0_i32_49] : memref<40x128xf32, #tpu.memory_space<any>> -> memref<1x128xf32, #tpu.memory_space<any>>
    %c11_i32_50 = arith.constant 11 : i32
    %c0_i32_51 = arith.constant 0 : i32
    %57 = tpu.memref_slice %arg3[%c11_i32_50, %c0_i32_51] : memref<16x128xf32, #tpu.memory_space<vmem>> -> memref<1x128xf32, #tpu.memory_space<vmem>>
    %58 = tpu.memref_slice %arg4[%c11_i32] : memref<16x!tpu.dma_semaphore, #tpu.memory_space<semaphore_mem>> -> memref<1x!tpu.dma_semaphore, #tpu.memory_space<semaphore_mem>>
    %59 = tpu.memref_squeeze %58 : memref<1x!tpu.dma_semaphore, #tpu.memory_space<semaphore_mem>> -> memref<!tpu.dma_semaphore, #tpu.memory_space<semaphore_mem>>
    tpu.enqueue_dma source(%56 : memref<1x128xf32, #tpu.memory_space<any>>) target(%57 : memref<1x128xf32, #tpu.memory_space<vmem>>) target_semaphore(%59 : memref<!tpu.dma_semaphore, #tpu.memory_space<semaphore_mem>>)
    %c1_52 = arith.constant 1 : index
    %c4_53 = arith.constant 4 : index
    %60 = memref.load %arg0[%c1_52, %c4_53] : memref<2x8xi32, #tpu.memory_space<smem>>
    %c12_i32 = arith.constant 12 : i32
    %c0_i32_54 = arith.constant 0 : i32
    %61 = tpu.memref_slice %arg1[%60, %c0_i32_54] : memref<40x128xf32, #tpu.memory_space<any>> -> memref<1x128xf32, #tpu.memory_space<any>>
    %c12_i32_55 = arith.constant 12 : i32
    %c0_i32_56 = arith.constant 0 : i32
    %62 = tpu.memref_slice %arg3[%c12_i32_55, %c0_i32_56] : memref<16x128xf32, #tpu.memory_space<vmem>> -> memref<1x128xf32, #tpu.memory_space<vmem>>
    %63 = tpu.memref_slice %arg4[%c12_i32] : memref<16x!tpu.dma_semaphore, #tpu.memory_space<semaphore_mem>> -> memref<1x!tpu.dma_semaphore, #tpu.memory_space<semaphore_mem>>
    %64 = tpu.memref_squeeze %63 : memref<1x!tpu.dma_semaphore, #tpu.memory_space<semaphore_mem>> -> memref<!tpu.dma_semaphore, #tpu.memory_space<semaphore_mem>>
    tpu.enqueue_dma source(%61 : memref<1x128xf32, #tpu.memory_space<any>>) target(%62 : memref<1x128xf32, #tpu.memory_space<vmem>>) target_semaphore(%64 : memref<!tpu.dma_semaphore, #tpu.memory_space<semaphore_mem>>)
    %c1_57 = arith.constant 1 : index
    %c5_58 = arith.constant 5 : index
    %65 = memref.load %arg0[%c1_57, %c5_58] : memref<2x8xi32, #tpu.memory_space<smem>>
    %c13_i32 = arith.constant 13 : i32
    %c0_i32_59 = arith.constant 0 : i32
    %66 = tpu.memref_slice %arg1[%65, %c0_i32_59] : memref<40x128xf32, #tpu.memory_space<any>> -> memref<1x128xf32, #tpu.memory_space<any>>
    %c13_i32_60 = arith.constant 13 : i32
    %c0_i32_61 = arith.constant 0 : i32
    %67 = tpu.memref_slice %arg3[%c13_i32_60, %c0_i32_61] : memref<16x128xf32, #tpu.memory_space<vmem>> -> memref<1x128xf32, #tpu.memory_space<vmem>>
    %68 = tpu.memref_slice %arg4[%c13_i32] : memref<16x!tpu.dma_semaphore, #tpu.memory_space<semaphore_mem>> -> memref<1x!tpu.dma_semaphore, #tpu.memory_space<semaphore_mem>>
    %69 = tpu.memref_squeeze %68 : memref<1x!tpu.dma_semaphore, #tpu.memory_space<semaphore_mem>> -> memref<!tpu.dma_semaphore, #tpu.memory_space<semaphore_mem>>
    tpu.enqueue_dma source(%66 : memref<1x128xf32, #tpu.memory_space<any>>) target(%67 : memref<1x128xf32, #tpu.memory_space<vmem>>) target_semaphore(%69 : memref<!tpu.dma_semaphore, #tpu.memory_space<semaphore_mem>>)
    %c1_62 = arith.constant 1 : index
    %c6_63 = arith.constant 6 : index
    %70 = memref.load %arg0[%c1_62, %c6_63] : memref<2x8xi32, #tpu.memory_space<smem>>
    %c14_i32 = arith.constant 14 : i32
    %c0_i32_64 = arith.constant 0 : i32
    %71 = tpu.memref_slice %arg1[%70, %c0_i32_64] : memref<40x128xf32, #tpu.memory_space<any>> -> memref<1x128xf32, #tpu.memory_space<any>>
    %c14_i32_65 = arith.constant 14 : i32
    %c0_i32_66 = arith.constant 0 : i32
    %72 = tpu.memref_slice %arg3[%c14_i32_65, %c0_i32_66] : memref<16x128xf32, #tpu.memory_space<vmem>> -> memref<1x128xf32, #tpu.memory_space<vmem>>
    %73 = tpu.memref_slice %arg4[%c14_i32] : memref<16x!tpu.dma_semaphore, #tpu.memory_space<semaphore_mem>> -> memref<1x!tpu.dma_semaphore, #tpu.memory_space<semaphore_mem>>
    %74 = tpu.memref_squeeze %73 : memref<1x!tpu.dma_semaphore, #tpu.memory_space<semaphore_mem>> -> memref<!tpu.dma_semaphore, #tpu.memory_space<semaphore_mem>>
    tpu.enqueue_dma source(%71 : memref<1x128xf32, #tpu.memory_space<any>>) target(%72 : memref<1x128xf32, #tpu.memory_space<vmem>>) target_semaphore(%74 : memref<!tpu.dma_semaphore, #tpu.memory_space<semaphore_mem>>)
    %c1_67 = arith.constant 1 : index
    %c7_68 = arith.constant 7 : index
    %75 = memref.load %arg0[%c1_67, %c7_68] : memref<2x8xi32, #tpu.memory_space<smem>>
    %c15_i32 = arith.constant 15 : i32
    %c0_i32_69 = arith.constant 0 : i32
    %76 = tpu.memref_slice %arg1[%75, %c0_i32_69] : memref<40x128xf32, #tpu.memory_space<any>> -> memref<1x128xf32, #tpu.memory_space<any>>
    %c15_i32_70 = arith.constant 15 : i32
    %c0_i32_71 = arith.constant 0 : i32
    %77 = tpu.memref_slice %arg3[%c15_i32_70, %c0_i32_71] : memref<16x128xf32, #tpu.memory_space<vmem>> -> memref<1x128xf32, #tpu.memory_space<vmem>>
    %78 = tpu.memref_slice %arg4[%c15_i32] : memref<16x!tpu.dma_semaphore, #tpu.memory_space<semaphore_mem>> -> memref<1x!tpu.dma_semaphore, #tpu.memory_space<semaphore_mem>>
    %79 = tpu.memref_squeeze %78 : memref<1x!tpu.dma_semaphore, #tpu.memory_space<semaphore_mem>> -> memref<!tpu.dma_semaphore, #tpu.memory_space<semaphore_mem>>
    tpu.enqueue_dma source(%76 : memref<1x128xf32, #tpu.memory_space<any>>) target(%77 : memref<1x128xf32, #tpu.memory_space<vmem>>) target_semaphore(%79 : memref<!tpu.dma_semaphore, #tpu.memory_space<semaphore_mem>>)
    %c0_i32_72 = arith.constant 0 : i32
    %c0_i32_73 = arith.constant 0 : i32
    %c0_i32_74 = arith.constant 0 : i32
    %80 = tpu.memref_slice %arg1[%c0_i32_73, %c0_i32_74] : memref<40x128xf32, #tpu.memory_space<any>> -> memref<1x128xf32, #tpu.memory_space<any>>
    %c0_i32_75 = arith.constant 0 : i32
    %c0_i32_76 = arith.constant 0 : i32
    %81 = tpu.memref_slice %arg3[%c0_i32_75, %c0_i32_76] : memref<16x128xf32, #tpu.memory_space<vmem>> -> memref<1x128xf32, #tpu.memory_space<vmem>>
    %82 = tpu.memref_slice %arg4[%c0_i32_72] : memref<16x!tpu.dma_semaphore, #tpu.memory_space<semaphore_mem>> -> memref<1x!tpu.dma_semaphore, #tpu.memory_space<semaphore_mem>>
    %83 = tpu.memref_squeeze %82 : memref<1x!tpu.dma_semaphore, #tpu.memory_space<semaphore_mem>> -> memref<!tpu.dma_semaphore, #tpu.memory_space<semaphore_mem>>
    tpu.wait_dma2 semaphore(%83 : memref<!tpu.dma_semaphore, #tpu.memory_space<semaphore_mem>>) src(%80 : memref<1x128xf32, #tpu.memory_space<any>>) dst(%81 : memref<1x128xf32, #tpu.memory_space<vmem>>)
    %c1_i32_77 = arith.constant 1 : i32
    %c0_i32_78 = arith.constant 0 : i32
    %c0_i32_79 = arith.constant 0 : i32
    %84 = tpu.memref_slice %arg1[%c0_i32_78, %c0_i32_79] : memref<40x128xf32, #tpu.memory_space<any>> -> memref<1x128xf32, #tpu.memory_space<any>>
    %c1_i32_80 = arith.constant 1 : i32
    %c0_i32_81 = arith.constant 0 : i32
    %85 = tpu.memref_slice %arg3[%c1_i32_80, %c0_i32_81] : memref<16x128xf32, #tpu.memory_space<vmem>> -> memref<1x128xf32, #tpu.memory_space<vmem>>
    %86 = tpu.memref_slice %arg4[%c1_i32_77] : memref<16x!tpu.dma_semaphore, #tpu.memory_space<semaphore_mem>> -> memref<1x!tpu.dma_semaphore, #tpu.memory_space<semaphore_mem>>
    %87 = tpu.memref_squeeze %86 : memref<1x!tpu.dma_semaphore, #tpu.memory_space<semaphore_mem>> -> memref<!tpu.dma_semaphore, #tpu.memory_space<semaphore_mem>>
    tpu.wait_dma2 semaphore(%87 : memref<!tpu.dma_semaphore, #tpu.memory_space<semaphore_mem>>) src(%84 : memref<1x128xf32, #tpu.memory_space<any>>) dst(%85 : memref<1x128xf32, #tpu.memory_space<vmem>>)
    %c2_i32_82 = arith.constant 2 : i32
    %c0_i32_83 = arith.constant 0 : i32
    %c0_i32_84 = arith.constant 0 : i32
    %88 = tpu.memref_slice %arg1[%c0_i32_83, %c0_i32_84] : memref<40x128xf32, #tpu.memory_space<any>> -> memref<1x128xf32, #tpu.memory_space<any>>
    %c2_i32_85 = arith.constant 2 : i32
    %c0_i32_86 = arith.constant 0 : i32
    %89 = tpu.memref_slice %arg3[%c2_i32_85, %c0_i32_86] : memref<16x128xf32, #tpu.memory_space<vmem>> -> memref<1x128xf32, #tpu.memory_space<vmem>>
    %90 = tpu.memref_slice %arg4[%c2_i32_82] : memref<16x!tpu.dma_semaphore, #tpu.memory_space<semaphore_mem>> -> memref<1x!tpu.dma_semaphore, #tpu.memory_space<semaphore_mem>>
    %91 = tpu.memref_squeeze %90 : memref<1x!tpu.dma_semaphore, #tpu.memory_space<semaphore_mem>> -> memref<!tpu.dma_semaphore, #tpu.memory_space<semaphore_mem>>
    tpu.wait_dma2 semaphore(%91 : memref<!tpu.dma_semaphore, #tpu.memory_space<semaphore_mem>>) src(%88 : memref<1x128xf32, #tpu.memory_space<any>>) dst(%89 : memref<1x128xf32, #tpu.memory_space<vmem>>)
    %c3_i32_87 = arith.constant 3 : i32
    %c0_i32_88 = arith.constant 0 : i32
    %c0_i32_89 = arith.constant 0 : i32
    %92 = tpu.memref_slice %arg1[%c0_i32_88, %c0_i32_89] : memref<40x128xf32, #tpu.memory_space<any>> -> memref<1x128xf32, #tpu.memory_space<any>>
    %c3_i32_90 = arith.constant 3 : i32
    %c0_i32_91 = arith.constant 0 : i32
    %93 = tpu.memref_slice %arg3[%c3_i32_90, %c0_i32_91] : memref<16x128xf32, #tpu.memory_space<vmem>> -> memref<1x128xf32, #tpu.memory_space<vmem>>
    %94 = tpu.memref_slice %arg4[%c3_i32_87] : memref<16x!tpu.dma_semaphore, #tpu.memory_space<semaphore_mem>> -> memref<1x!tpu.dma_semaphore, #tpu.memory_space<semaphore_mem>>
    %95 = tpu.memref_squeeze %94 : memref<1x!tpu.dma_semaphore, #tpu.memory_space<semaphore_mem>> -> memref<!tpu.dma_semaphore, #tpu.memory_space<semaphore_mem>>
    tpu.wait_dma2 semaphore(%95 : memref<!tpu.dma_semaphore, #tpu.memory_space<semaphore_mem>>) src(%92 : memref<1x128xf32, #tpu.memory_space<any>>) dst(%93 : memref<1x128xf32, #tpu.memory_space<vmem>>)
    %c4_i32_92 = arith.constant 4 : i32
    %c0_i32_93 = arith.constant 0 : i32
    %c0_i32_94 = arith.constant 0 : i32
    %96 = tpu.memref_slice %arg1[%c0_i32_93, %c0_i32_94] : memref<40x128xf32, #tpu.memory_space<any>> -> memref<1x128xf32, #tpu.memory_space<any>>
    %c4_i32_95 = arith.constant 4 : i32
    %c0_i32_96 = arith.constant 0 : i32
    %97 = tpu.memref_slice %arg3[%c4_i32_95, %c0_i32_96] : memref<16x128xf32, #tpu.memory_space<vmem>> -> memref<1x128xf32, #tpu.memory_space<vmem>>
    %98 = tpu.memref_slice %arg4[%c4_i32_92] : memref<16x!tpu.dma_semaphore, #tpu.memory_space<semaphore_mem>> -> memref<1x!tpu.dma_semaphore, #tpu.memory_space<semaphore_mem>>
    %99 = tpu.memref_squeeze %98 : memref<1x!tpu.dma_semaphore, #tpu.memory_space<semaphore_mem>> -> memref<!tpu.dma_semaphore, #tpu.memory_space<semaphore_mem>>
    tpu.wait_dma2 semaphore(%99 : memref<!tpu.dma_semaphore, #tpu.memory_space<semaphore_mem>>) src(%96 : memref<1x128xf32, #tpu.memory_space<any>>) dst(%97 : memref<1x128xf32, #tpu.memory_space<vmem>>)
    %c5_i32_97 = arith.constant 5 : i32
    %c0_i32_98 = arith.constant 0 : i32
    %c0_i32_99 = arith.constant 0 : i32
    %100 = tpu.memref_slice %arg1[%c0_i32_98, %c0_i32_99] : memref<40x128xf32, #tpu.memory_space<any>> -> memref<1x128xf32, #tpu.memory_space<any>>
    %c5_i32_100 = arith.constant 5 : i32
    %c0_i32_101 = arith.constant 0 : i32
    %101 = tpu.memref_slice %arg3[%c5_i32_100, %c0_i32_101] : memref<16x128xf32, #tpu.memory_space<vmem>> -> memref<1x128xf32, #tpu.memory_space<vmem>>
    %102 = tpu.memref_slice %arg4[%c5_i32_97] : memref<16x!tpu.dma_semaphore, #tpu.memory_space<semaphore_mem>> -> memref<1x!tpu.dma_semaphore, #tpu.memory_space<semaphore_mem>>
    %103 = tpu.memref_squeeze %102 : memref<1x!tpu.dma_semaphore, #tpu.memory_space<semaphore_mem>> -> memref<!tpu.dma_semaphore, #tpu.memory_space<semaphore_mem>>
    tpu.wait_dma2 semaphore(%103 : memref<!tpu.dma_semaphore, #tpu.memory_space<semaphore_mem>>) src(%100 : memref<1x128xf32, #tpu.memory_space<any>>) dst(%101 : memref<1x128xf32, #tpu.memory_space<vmem>>)
    %c6_i32_102 = arith.constant 6 : i32
    %c0_i32_103 = arith.constant 0 : i32
    %c0_i32_104 = arith.constant 0 : i32
    %104 = tpu.memref_slice %arg1[%c0_i32_103, %c0_i32_104] : memref<40x128xf32, #tpu.memory_space<any>> -> memref<1x128xf32, #tpu.memory_space<any>>
    %c6_i32_105 = arith.constant 6 : i32
    %c0_i32_106 = arith.constant 0 : i32
    %105 = tpu.memref_slice %arg3[%c6_i32_105, %c0_i32_106] : memref<16x128xf32, #tpu.memory_space<vmem>> -> memref<1x128xf32, #tpu.memory_space<vmem>>
    %106 = tpu.memref_slice %arg4[%c6_i32_102] : memref<16x!tpu.dma_semaphore, #tpu.memory_space<semaphore_mem>> -> memref<1x!tpu.dma_semaphore, #tpu.memory_space<semaphore_mem>>
    %107 = tpu.memref_squeeze %106 : memref<1x!tpu.dma_semaphore, #tpu.memory_space<semaphore_mem>> -> memref<!tpu.dma_semaphore, #tpu.memory_space<semaphore_mem>>
    tpu.wait_dma2 semaphore(%107 : memref<!tpu.dma_semaphore, #tpu.memory_space<semaphore_mem>>) src(%104 : memref<1x128xf32, #tpu.memory_space<any>>) dst(%105 : memref<1x128xf32, #tpu.memory_space<vmem>>)
    %c7_i32_107 = arith.constant 7 : i32
    %c0_i32_108 = arith.constant 0 : i32
    %c0_i32_109 = arith.constant 0 : i32
    %108 = tpu.memref_slice %arg1[%c0_i32_108, %c0_i32_109] : memref<40x128xf32, #tpu.memory_space<any>> -> memref<1x128xf32, #tpu.memory_space<any>>
    %c7_i32_110 = arith.constant 7 : i32
    %c0_i32_111 = arith.constant 0 : i32
    %109 = tpu.memref_slice %arg3[%c7_i32_110, %c0_i32_111] : memref<16x128xf32, #tpu.memory_space<vmem>> -> memref<1x128xf32, #tpu.memory_space<vmem>>
    %110 = tpu.memref_slice %arg4[%c7_i32_107] : memref<16x!tpu.dma_semaphore, #tpu.memory_space<semaphore_mem>> -> memref<1x!tpu.dma_semaphore, #tpu.memory_space<semaphore_mem>>
    %111 = tpu.memref_squeeze %110 : memref<1x!tpu.dma_semaphore, #tpu.memory_space<semaphore_mem>> -> memref<!tpu.dma_semaphore, #tpu.memory_space<semaphore_mem>>
    tpu.wait_dma2 semaphore(%111 : memref<!tpu.dma_semaphore, #tpu.memory_space<semaphore_mem>>) src(%108 : memref<1x128xf32, #tpu.memory_space<any>>) dst(%109 : memref<1x128xf32, #tpu.memory_space<vmem>>)
    %c8_i32_112 = arith.constant 8 : i32
    %c0_i32_113 = arith.constant 0 : i32
    %c0_i32_114 = arith.constant 0 : i32
    %112 = tpu.memref_slice %arg1[%c0_i32_113, %c0_i32_114] : memref<40x128xf32, #tpu.memory_space<any>> -> memref<1x128xf32, #tpu.memory_space<any>>
    %c8_i32_115 = arith.constant 8 : i32
    %c0_i32_116 = arith.constant 0 : i32
    %113 = tpu.memref_slice %arg3[%c8_i32_115, %c0_i32_116] : memref<16x128xf32, #tpu.memory_space<vmem>> -> memref<1x128xf32, #tpu.memory_space<vmem>>
    %114 = tpu.memref_slice %arg4[%c8_i32_112] : memref<16x!tpu.dma_semaphore, #tpu.memory_space<semaphore_mem>> -> memref<1x!tpu.dma_semaphore, #tpu.memory_space<semaphore_mem>>
    %115 = tpu.memref_squeeze %114 : memref<1x!tpu.dma_semaphore, #tpu.memory_space<semaphore_mem>> -> memref<!tpu.dma_semaphore, #tpu.memory_space<semaphore_mem>>
    tpu.wait_dma2 semaphore(%115 : memref<!tpu.dma_semaphore, #tpu.memory_space<semaphore_mem>>) src(%112 : memref<1x128xf32, #tpu.memory_space<any>>) dst(%113 : memref<1x128xf32, #tpu.memory_space<vmem>>)
    %c9_i32_117 = arith.constant 9 : i32
    %c0_i32_118 = arith.constant 0 : i32
    %c0_i32_119 = arith.constant 0 : i32
    %116 = tpu.memref_slice %arg1[%c0_i32_118, %c0_i32_119] : memref<40x128xf32, #tpu.memory_space<any>> -> memref<1x128xf32, #tpu.memory_space<any>>
    %c9_i32_120 = arith.constant 9 : i32
    %c0_i32_121 = arith.constant 0 : i32
    %117 = tpu.memref_slice %arg3[%c9_i32_120, %c0_i32_121] : memref<16x128xf32, #tpu.memory_space<vmem>> -> memref<1x128xf32, #tpu.memory_space<vmem>>
    %118 = tpu.memref_slice %arg4[%c9_i32_117] : memref<16x!tpu.dma_semaphore, #tpu.memory_space<semaphore_mem>> -> memref<1x!tpu.dma_semaphore, #tpu.memory_space<semaphore_mem>>
    %119 = tpu.memref_squeeze %118 : memref<1x!tpu.dma_semaphore, #tpu.memory_space<semaphore_mem>> -> memref<!tpu.dma_semaphore, #tpu.memory_space<semaphore_mem>>
    tpu.wait_dma2 semaphore(%119 : memref<!tpu.dma_semaphore, #tpu.memory_space<semaphore_mem>>) src(%116 : memref<1x128xf32, #tpu.memory_space<any>>) dst(%117 : memref<1x128xf32, #tpu.memory_space<vmem>>)
    %c10_i32_122 = arith.constant 10 : i32
    %c0_i32_123 = arith.constant 0 : i32
    %c0_i32_124 = arith.constant 0 : i32
    %120 = tpu.memref_slice %arg1[%c0_i32_123, %c0_i32_124] : memref<40x128xf32, #tpu.memory_space<any>> -> memref<1x128xf32, #tpu.memory_space<any>>
    %c10_i32_125 = arith.constant 10 : i32
    %c0_i32_126 = arith.constant 0 : i32
    %121 = tpu.memref_slice %arg3[%c10_i32_125, %c0_i32_126] : memref<16x128xf32, #tpu.memory_space<vmem>> -> memref<1x128xf32, #tpu.memory_space<vmem>>
    %122 = tpu.memref_slice %arg4[%c10_i32_122] : memref<16x!tpu.dma_semaphore, #tpu.memory_space<semaphore_mem>> -> memref<1x!tpu.dma_semaphore, #tpu.memory_space<semaphore_mem>>
    %123 = tpu.memref_squeeze %122 : memref<1x!tpu.dma_semaphore, #tpu.memory_space<semaphore_mem>> -> memref<!tpu.dma_semaphore, #tpu.memory_space<semaphore_mem>>
    tpu.wait_dma2 semaphore(%123 : memref<!tpu.dma_semaphore, #tpu.memory_space<semaphore_mem>>) src(%120 : memref<1x128xf32, #tpu.memory_space<any>>) dst(%121 : memref<1x128xf32, #tpu.memory_space<vmem>>)
    %c11_i32_127 = arith.constant 11 : i32
    %c0_i32_128 = arith.constant 0 : i32
    %c0_i32_129 = arith.constant 0 : i32
    %124 = tpu.memref_slice %arg1[%c0_i32_128, %c0_i32_129] : memref<40x128xf32, #tpu.memory_space<any>> -> memref<1x128xf32, #tpu.memory_space<any>>
    %c11_i32_130 = arith.constant 11 : i32
    %c0_i32_131 = arith.constant 0 : i32
    %125 = tpu.memref_slice %arg3[%c11_i32_130, %c0_i32_131] : memref<16x128xf32, #tpu.memory_space<vmem>> -> memref<1x128xf32, #tpu.memory_space<vmem>>
    %126 = tpu.memref_slice %arg4[%c11_i32_127] : memref<16x!tpu.dma_semaphore, #tpu.memory_space<semaphore_mem>> -> memref<1x!tpu.dma_semaphore, #tpu.memory_space<semaphore_mem>>
    %127 = tpu.memref_squeeze %126 : memref<1x!tpu.dma_semaphore, #tpu.memory_space<semaphore_mem>> -> memref<!tpu.dma_semaphore, #tpu.memory_space<semaphore_mem>>
    tpu.wait_dma2 semaphore(%127 : memref<!tpu.dma_semaphore, #tpu.memory_space<semaphore_mem>>) src(%124 : memref<1x128xf32, #tpu.memory_space<any>>) dst(%125 : memref<1x128xf32, #tpu.memory_space<vmem>>)
    %c12_i32_132 = arith.constant 12 : i32
    %c0_i32_133 = arith.constant 0 : i32
    %c0_i32_134 = arith.constant 0 : i32
    %128 = tpu.memref_slice %arg1[%c0_i32_133, %c0_i32_134] : memref<40x128xf32, #tpu.memory_space<any>> -> memref<1x128xf32, #tpu.memory_space<any>>
    %c12_i32_135 = arith.constant 12 : i32
    %c0_i32_136 = arith.constant 0 : i32
    %129 = tpu.memref_slice %arg3[%c12_i32_135, %c0_i32_136] : memref<16x128xf32, #tpu.memory_space<vmem>> -> memref<1x128xf32, #tpu.memory_space<vmem>>
    %130 = tpu.memref_slice %arg4[%c12_i32_132] : memref<16x!tpu.dma_semaphore, #tpu.memory_space<semaphore_mem>> -> memref<1x!tpu.dma_semaphore, #tpu.memory_space<semaphore_mem>>
    %131 = tpu.memref_squeeze %130 : memref<1x!tpu.dma_semaphore, #tpu.memory_space<semaphore_mem>> -> memref<!tpu.dma_semaphore, #tpu.memory_space<semaphore_mem>>
    tpu.wait_dma2 semaphore(%131 : memref<!tpu.dma_semaphore, #tpu.memory_space<semaphore_mem>>) src(%128 : memref<1x128xf32, #tpu.memory_space<any>>) dst(%129 : memref<1x128xf32, #tpu.memory_space<vmem>>)
    %c13_i32_137 = arith.constant 13 : i32
    %c0_i32_138 = arith.constant 0 : i32
    %c0_i32_139 = arith.constant 0 : i32
    %132 = tpu.memref_slice %arg1[%c0_i32_138, %c0_i32_139] : memref<40x128xf32, #tpu.memory_space<any>> -> memref<1x128xf32, #tpu.memory_space<any>>
    %c13_i32_140 = arith.constant 13 : i32
    %c0_i32_141 = arith.constant 0 : i32
    %133 = tpu.memref_slice %arg3[%c13_i32_140, %c0_i32_141] : memref<16x128xf32, #tpu.memory_space<vmem>> -> memref<1x128xf32, #tpu.memory_space<vmem>>
    %134 = tpu.memref_slice %arg4[%c13_i32_137] : memref<16x!tpu.dma_semaphore, #tpu.memory_space<semaphore_mem>> -> memref<1x!tpu.dma_semaphore, #tpu.memory_space<semaphore_mem>>
    %135 = tpu.memref_squeeze %134 : memref<1x!tpu.dma_semaphore, #tpu.memory_space<semaphore_mem>> -> memref<!tpu.dma_semaphore, #tpu.memory_space<semaphore_mem>>
    tpu.wait_dma2 semaphore(%135 : memref<!tpu.dma_semaphore, #tpu.memory_space<semaphore_mem>>) src(%132 : memref<1x128xf32, #tpu.memory_space<any>>) dst(%133 : memref<1x128xf32, #tpu.memory_space<vmem>>)
    %c14_i32_142 = arith.constant 14 : i32
    %c0_i32_143 = arith.constant 0 : i32
    %c0_i32_144 = arith.constant 0 : i32
    %136 = tpu.memref_slice %arg1[%c0_i32_143, %c0_i32_144] : memref<40x128xf32, #tpu.memory_space<any>> -> memref<1x128xf32, #tpu.memory_space<any>>
    %c14_i32_145 = arith.constant 14 : i32
    %c0_i32_146 = arith.constant 0 : i32
    %137 = tpu.memref_slice %arg3[%c14_i32_145, %c0_i32_146] : memref<16x128xf32, #tpu.memory_space<vmem>> -> memref<1x128xf32, #tpu.memory_space<vmem>>
    %138 = tpu.memref_slice %arg4[%c14_i32_142] : memref<16x!tpu.dma_semaphore, #tpu.memory_space<semaphore_mem>> -> memref<1x!tpu.dma_semaphore, #tpu.memory_space<semaphore_mem>>
    %139 = tpu.memref_squeeze %138 : memref<1x!tpu.dma_semaphore, #tpu.memory_space<semaphore_mem>> -> memref<!tpu.dma_semaphore, #tpu.memory_space<semaphore_mem>>
    tpu.wait_dma2 semaphore(%139 : memref<!tpu.dma_semaphore, #tpu.memory_space<semaphore_mem>>) src(%136 : memref<1x128xf32, #tpu.memory_space<any>>) dst(%137 : memref<1x128xf32, #tpu.memory_space<vmem>>)
    %c15_i32_147 = arith.constant 15 : i32
    %c0_i32_148 = arith.constant 0 : i32
    %c0_i32_149 = arith.constant 0 : i32
    %140 = tpu.memref_slice %arg1[%c0_i32_148, %c0_i32_149] : memref<40x128xf32, #tpu.memory_space<any>> -> memref<1x128xf32, #tpu.memory_space<any>>
    %c15_i32_150 = arith.constant 15 : i32
    %c0_i32_151 = arith.constant 0 : i32
    %141 = tpu.memref_slice %arg3[%c15_i32_150, %c0_i32_151] : memref<16x128xf32, #tpu.memory_space<vmem>> -> memref<1x128xf32, #tpu.memory_space<vmem>>
    %142 = tpu.memref_slice %arg4[%c15_i32_147] : memref<16x!tpu.dma_semaphore, #tpu.memory_space<semaphore_mem>> -> memref<1x!tpu.dma_semaphore, #tpu.memory_space<semaphore_mem>>
    %143 = tpu.memref_squeeze %142 : memref<1x!tpu.dma_semaphore, #tpu.memory_space<semaphore_mem>> -> memref<!tpu.dma_semaphore, #tpu.memory_space<semaphore_mem>>
    tpu.wait_dma2 semaphore(%143 : memref<!tpu.dma_semaphore, #tpu.memory_space<semaphore_mem>>) src(%140 : memref<1x128xf32, #tpu.memory_space<any>>) dst(%141 : memref<1x128xf32, #tpu.memory_space<vmem>>)
    %c0_152 = arith.constant 0 : index
    %c0_153 = arith.constant 0 : index
    %144 = vector.load %arg3[%c0_152, %c0_153] : memref<16x128xf32, #tpu.memory_space<vmem>>, vector<16x128xf32>
    %145 = vector.shape_cast %144 : vector<16x128xf32> to vector<2x8x128xf32>
    %cst = arith.constant dense<0xFF800000> : vector<2x128xf32>
    %146 = vector.multi_reduction <maximumf>, %145, %cst [1] : vector<2x8x128xf32> to vector<2x128xf32>
    %c0_154 = arith.constant 0 : index
    %c0_155 = arith.constant 0 : index
    %147 = vector.load %arg2[%c0_154, %c0_155] : memref<2x128xf32, #tpu.memory_space<vmem>>, vector<2x128xf32>
    tpu.vector_store %arg2[%c0_154, %c0_155], %146 {strides = array<i32>} : memref<2x128xf32, #tpu.memory_space<vmem>>, vector<2x128xf32>,
    return
  }
}

</mosaic_0001>

<llo_original>
// kernel: batch_tree_encoder_forward.2
$region0: #{batch_tree_encoder_forward.2}
  #allocation0 [shape = 'u32[]', space=smem, size = 0x4, offset = 0x4, fixed_abs, tag = 'smem constant byte address 0x4 - core index']
  #allocation1 [shape = 'u32[144,128]{1,0:T(1,128)}', space=vmem, size = 0x12000, scoped, tag = 'internal scratch']
  %s0 = inlined_call_operand.vmem [shape: f32[40,128], index: 0, kind: input, shape index: {}]
  %s1 = inlined_call_operand.vmem [shape: f32[128,128], index: 1, kind: input, shape index: {}]
  %s2 = inlined_call_operand.vmem [shape: f32[1,128], index: 2, kind: input, shape index: {}]
  %s3 = inlined_call_operand.vmem [shape: f32[40,128], index: 3, kind: output, shape index: {}]
  %s4 = sld [smem:[#allocation0]]
  $region45: #{batch_tree_encoder_forward.2} parent=0
    _
  %s6 = ssub.s32 1, %s4
  %s7 = scalar_select 0, %s6, %s4
  loop: start=0, step=1, limit=7
  $region2: #{batch_tree_encoder_forward.2} parent=0 // loop_pre_header
    _
  $region3: #{batch_tree_encoder_forward.2} parent=0 // loop_header
    %s9 = sphi 0, %s13
    %p10 = scmp.ge.s32.totalorder %s9, 7
    %s19 = sphi 0, %s21
    %s22 = sphi 0, %s19
    %s23 = sphi 0, %s22
    %s39 = sphi 0, %s23
    %s43 = sphi 0, %s43
    %s45 = sphi 0, %s43
    %s46 = sphi 0, %s45
    %s60 = sphi 0, %s46
    %s64 = sphi 0, %s64
    %s66 = sphi 0, %s64
    %s67 = sphi 0, %s66
    %s81 = sphi 0, %s67
    %s87 = sphi 0, %s89
    %s90 = sphi 0, %s87
    %s91 = sphi 0, %s90
    %s107 = sphi 0, %s91
  $region4: #{batch_tree_encoder_forward.2} parent=0 // loop_header_branch
    %12 = sbr.rel (%p10) target = $region8
  $region5: #{batch_tree_encoder_forward.2} parent=0 // loop_body
    %s14 = ssub.s32 %s9, 1
    %s15 = ssub.s32 %s9, 2
    %s16 = sadd.s32 %s9, 1
    %s17 = ssub.s32 %s9, %s16
    %p18 = scmp.eq.s32.totalorder %s17, 0
    %s20 = sadd.s32 %s19, 1
    %s21 = scalar_select %p18, %s19, %s20
    %p24 = pneg %p18
    %p25 = scmp.eq.s32.totalorder %s9, 4
    %p26 = por %p24, %p25
    %p27 = scmp.ne.s32.totalorder %s19, %s22
    %p28 = scmp.eq.s32.totalorder %s9, 0
    %p29 = por %p27, %p28
    %p30 = scmp.ne.s32.totalorder %s19, %s22
    %p31 = scmp.eq.s32.totalorder %s14, 4
    %p32 = por %p30, %p31
    %p33 = scmp.ne.s32.totalorder %s22, %s23
    %p34 = scmp.eq.s32.totalorder %s14, 0
    %p35 = por %p33, %p34
    %p36 = scmp.ne.s32.totalorder %s22, %s23
    %p37 = scmp.eq.s32.totalorder %s15, 4
    %p38 = por %p36, %p37
    %p40 = scmp.ne.s32.totalorder %s23, %s39
    %p41 = scmp.eq.s32.totalorder %s15, 0
    %p42 = por %p40, %p41
    %s44 = sadd.s32 %s43, 1
    %p47 = scmp.eq.s32.totalorder %s9, 4
    %p48 = scmp.ne.s32.totalorder %s43, %s45
    %p49 = scmp.eq.s32.totalorder %s9, 0
    %p50 = por %p48, %p49
    %p51 = scmp.ne.s32.totalorder %s43, %s45
    %p52 = scmp.eq.s32.totalorder %s14, 4
    %p53 = por %p51, %p52
    %p54 = scmp.ne.s32.totalorder %s45, %s46
    %p55 = scmp.eq.s32.totalorder %s14, 0
    %p56 = por %p54, %p55
    %p57 = scmp.ne.s32.totalorder %s45, %s46
    %p58 = scmp.eq.s32.totalorder %s15, 4
    %p59 = por %p57, %p58
    %p61 = scmp.ne.s32.totalorder %s46, %s60
    %p62 = scmp.eq.s32.totalorder %s15, 0
    %p63 = por %p61, %p62
    %s65 = sadd.s32 %s64, 1
    %p68 = scmp.eq.s32.totalorder %s9, 4
    %p69 = scmp.ne.s32.totalorder %s64, %s66
    %p70 = scmp.eq.s32.totalorder %s9, 0
    %p71 = por %p69, %p70
    %p72 = scmp.ne.s32.totalorder %s64, %s66
    %p73 = scmp.eq.s32.totalorder %s14, 4
    %p74 = por %p72, %p73
    %p75 = scmp.ne.s32.totalorder %s66, %s67
    %p76 = scmp.eq.s32.totalorder %s14, 0
    %p77 = por %p75, %p76
    %p78 = scmp.ne.s32.totalorder %s66, %s67
    %p79 = scmp.eq.s32.totalorder %s15, 4
    %p80 = por %p78, %p79
    %p82 = scmp.ne.s32.totalorder %s67, %s81
    %p83 = scmp.eq.s32.totalorder %s15, 0
    %p84 = por %p82, %p83
    %s85 = ssub.s32 %s9, %s16
    %p86 = scmp.eq.s32.totalorder %s85, 0
    %s88 = sadd.s32 %s87, 1
    %s89 = scalar_select %p86, %s87, %s88
    %p92 = pneg %p86
    %p93 = scmp.eq.s32.totalorder %s9, 4
    %p94 = por %p92, %p93
    %p95 = scmp.ne.s32.totalorder %s87, %s90
    %p96 = scmp.eq.s32.totalorder %s9, 0
    %p97 = por %p95, %p96
    %p98 = scmp.ne.s32.totalorder %s87, %s90
    %p99 = scmp.eq.s32.totalorder %s14, 4
    %p100 = por %p98, %p99
    %p101 = scmp.ne.s32.totalorder %s90, %s91
    %p102 = scmp.eq.s32.totalorder %s14, 0
    %p103 = por %p101, %p102
    %p104 = scmp.ne.s32.totalorder %s90, %s91
    %p105 = scmp.eq.s32.totalorder %s15, 4
    %p106 = por %p104, %p105
    %p108 = scmp.ne.s32.totalorder %s91, %s107
    %p109 = scmp.eq.s32.totalorder %s15, 0
    %p110 = por %p108, %p109
    %p111 = scmp.le.s32.totalorder 1, %s9
    %p112 = scmp.lt.s32.totalorder %s9, 6
    %p113 = pnand %p111, %p112
    %p114 = pneg %p113
    // Predicated region
    $region9: #{batch_tree_encoder_forward.2} parent=5 // pred_check
      _
    $region10: #{batch_tree_encoder_forward.2} parent=5 // pred_check_branch
      %116 = sbr.rel (%p113) target = $region12
    $region11: #{batch_tree_encoder_forward.2} parent=5 // pred_region
      %s117 = ssub.s32 %s9, 1
      // Predicated region
      $region13: #{batch_tree_encoder_forward.2} parent=11 // pred_check
        %p118 = pneg %p56
      $region14: #{batch_tree_encoder_forward.2} parent=11 // pred_check_branch
        %120 = sbr.rel (%p118) target = $region16
      $region15: #{batch_tree_encoder_forward.2} parent=11 // pred_region
        _
      $region16: #{batch_tree_encoder_forward.2} parent=11 // pred_fallthru
        _
      // Predicated region
      $region17: #{batch_tree_encoder_forward.2} parent=11 // pred_check
        %p121 = pneg %p77
      $region18: #{batch_tree_encoder_forward.2} parent=11 // pred_check_branch
        %123 = sbr.rel (%p121) target = $region20
      $region19: #{batch_tree_encoder_forward.2} parent=11 // pred_region
        _
      $region20: #{batch_tree_encoder_forward.2} parent=11 // pred_fallthru
        _
    $region12: #{batch_tree_encoder_forward.2} parent=5 // pred_fallthru
      _
    %p124 = scmp.lt.s32.totalorder %s9, 5
    // Predicated region
    $region21: #{batch_tree_encoder_forward.2} parent=5 // pred_check
      %p125 = pneg %p124
    $region22: #{batch_tree_encoder_forward.2} parent=5 // pred_check_branch
      %127 = sbr.rel (%p125) target = $region24
    $region23: #{batch_tree_encoder_forward.2} parent=5 // pred_region
      // Predicated region
      $region25: #{batch_tree_encoder_forward.2} parent=23 // pred_check
        %p128 = pneg %p29
      $region26: #{batch_tree_encoder_forward.2} parent=23 // pred_check_branch
        %130 = sbr.rel (%p128) target = $region28
      $region27: #{batch_tree_encoder_forward.2} parent=23 // pred_region
        %p131 = scmp.lt.s32.totalorder %s9, 4
        %s132 = scalar_select %p131, %s9, 4
        %s133 = smul.addr %s132, 8
        %s134 = scalar_lea.vmem %s0, %s133
      $region28: #{batch_tree_encoder_forward.2} parent=23 // pred_fallthru
        _
    $region24: #{batch_tree_encoder_forward.2} parent=5 // pred_fallthru
      _
    %p135 = scmp.le.s32.totalorder 1, %s9
    %p136 = scmp.lt.s32.totalorder %s9, 6
    %p137 = pnand %p135, %p136
    %p138 = pneg %p137
    // Predicated region
    $region29: #{batch_tree_encoder_forward.2} parent=5 // pred_check
      _
    $region30: #{batch_tree_encoder_forward.2} parent=5 // pred_check_branch
      %140 = sbr.rel (%p137) target = $region32
    $region31: #{batch_tree_encoder_forward.2} parent=5 // pred_region
      %s141 = ssub.s32 %s9, 1
      %p142 = scmp.lt.s32.totalorder %s14, 4
      %s143 = scalar_select %p142, %s14, 4
      %s144 = smul.addr %s143, 8
      %s145 = scalar_lea.vmem %s0, %s144
      %p146 = pneg %p35
      %p147 = pneg %p32
      %p148 = pneg %p56
      %p149 = pneg %p53
      %p150 = pneg %p77
      %p151 = pneg %p74
      %p152 = pneg %p103
      %p153 = pneg %p100
      %p154 = scmp.lt.s32.totalorder %s14, 4
      %s155 = scalar_select %p154, %s14, 4
      %s156 = smul.addr %s155, 8
      %s157 = scalar_lea.vmem %s3, %s156
      %p158 = scmp.lt.s32.totalorder %s14, 4
      %s159 = scalar_select %p158, %s14, 4
      %s160 = smul.addr %s159, 8
      %s161 = scalar_lea.vmem %s0, %s160
      %p162 = scmp.lt.s32.totalorder %s14, 4
      %s163 = scalar_select %p162, %s14, 4
      %s164 = smul.addr %s163, 8
      %s165 = scalar_lea.vmem %s3, %s164
      %s167 = smul.u32 %s14, 8
      %v168 = vld [vmem:[%s161] sm:$0xff]
      %v169 = vpack.c.bf16 %v168, %v168
      %v170 = vld [vmem:[%s1] sm:$0xff]
      %v171 = vld [vmem:[%s1 + $0x8] sm:$0xff]
      %v172 = vld [vmem:[%s1 + $0x10] sm:$0xff]
      %v173 = vld [vmem:[%s1 + $0x18] sm:$0xff]
      %v174 = vld [vmem:[%s1 + $0x20] sm:$0xff]
      %v175 = vld [vmem:[%s1 + $0x28] sm:$0xff]
      %v176 = vld [vmem:[%s1 + $0x30] sm:$0xff]
      %v177 = vld [vmem:[%s1 + $0x38] sm:$0xff]
      %v178 = vld [vmem:[%s1 + $0x40] sm:$0xff]
      %v179 = vld [vmem:[%s1 + $0x48] sm:$0xff]
      %v180 = vld [vmem:[%s1 + $0x50] sm:$0xff]
      %v181 = vld [vmem:[%s1 + $0x58] sm:$0xff]
      %v182 = vld [vmem:[%s1 + $0x60] sm:$0xff]
      %v183 = vld [vmem:[%s1 + $0x68] sm:$0xff]
      %v184 = vld [vmem:[%s1 + $0x70] sm:$0xff]
      %v185 = vld [vmem:[%s1 + $0x78] sm:$0xff]
      %v186 = vpack.c.bf16 %v171, %v170
      %v187 = vpack.c.bf16 %v173, %v172
      %v188 = vpack.c.bf16 %v175, %v174
      %v189 = vpack.c.bf16 %v177, %v176
      %v190 = vpack.c.bf16 %v179, %v178
      %v191 = vpack.c.bf16 %v181, %v180
      %v192 = vpack.c.bf16 %v183, %v182
      %v193 = vpack.c.bf16 %v185, %v184
      %v194 = vld [vmem:[%s2] sm:$0x1]
      %v196 = vlaneseq
      %v197 = vshrl.u32 %v196, 7
      %v198 = vsub.s32 0, %v197
      %v199 = vrot.slane %v194, %v198
      %201 = vmatprep.subr.bf16.mxu0 0
      %202 = vmatpush1.bf16.msra.mxu0 %v186
      %203 = vmatprep.subr.bf16.mxu0 0
      %204 = vmatpush1.bf16.msra.mxu0 %v187
      %205 = vmatprep.subr.bf16.mxu0 0
      %206 = vmatpush1.bf16.msra.mxu0 %v188
      %207 = vmatprep.subr.bf16.mxu0 0
      %208 = vmatpush1.bf16.msra.mxu0 %v189
      %209 = vmatprep.subr.bf16.mxu0 0
      %210 = vmatpush1.bf16.msra.mxu0 %v190
      %211 = vmatprep.subr.bf16.mxu0 0
      %212 = vmatpush1.bf16.msra.mxu0 %v191
      %213 = vmatprep.subr.bf16.mxu0 0
      %214 = vmatpush1.bf16.msra.mxu0 %v192
      %215 = vmatprep.subr.bf16.mxu0 0
      %216 = vmatpush1.bf16.msra.mxu0 %v193
      %217 = vmatprep.subr.bf16.mxu0 0
      %218 = vmatpush1.bf16.msra.mxu0 0
      %219 = vmatprep.subr.bf16.mxu0 0
      %220 = vmatpush1.bf16.msra.mxu0 0
      %221 = vmatprep.subr.bf16.mxu0 0
      %222 = vmatpush1.bf16.msra.mxu0 0
      %223 = vmatprep.subr.bf16.mxu0 0
      %224 = vmatpush1.bf16.msra.mxu0 0
      %225 = vmatprep.subr.bf16.mxu0 0
      %226 = vmatpush1.bf16.msra.mxu0 0
      %227 = vmatprep.subr.bf16.mxu0 0
      %228 = vmatpush1.bf16.msra.mxu0 0
      %229 = vmatprep.subr.bf16.mxu0 0
      %230 = vmatpush1.bf16.msra.mxu0 0
      %231 = vmatprep.subr.bf16.mxu0 0
      %232 = vmatpush1.bf16.msra.mxu0 0
      %233 = vmatprep.mubr.bf16.mxu0 0
      %234 = vmatmul.mubr.bf16.gmra.mrb[0].mxu0 %v169
      %v235 = vpop.f32.mrb[0].mxu0
      %v236 = vadd.f32 %v199, %v235
      %v237 = vpop.f32.mrb[0].mxu0
      %v238 = vpop.f32.mrb[0].mxu0
      %v239 = vpop.f32.mrb[0].mxu0
      %240 = vdwg.mxu0
      %v241 = vlaneseq
      %v242 = vshrl.u32 %v241, 7
      %v243 = vstv %s167
      %v244 = vadd.s32 %v243, %v242
      %vm245 = vcmp.lt.s32.totalorder %v244, 32
      %v246 = vsel %vm245, %v236, 0.0
      %247 = vst [vmem:[%s165] sm:$0xff] %v246
      %p248 = scmp.lt.s32.totalorder %s14, 4
      %s249 = scalar_select %p248, %s14, 4
      %s250 = smul.addr %s249, 8
      %s251 = scalar_lea.vmem %s3, %s250
      // Predicated region
      $region33: #{batch_tree_encoder_forward.2} parent=31 // pred_check
        %p252 = pneg %p100
      $region34: #{batch_tree_encoder_forward.2} parent=31 // pred_check_branch
        %254 = sbr.rel (%p252) target = $region36
      $region35: #{batch_tree_encoder_forward.2} parent=31 // pred_region
        _
      $region36: #{batch_tree_encoder_forward.2} parent=31 // pred_fallthru
        _
    $region32: #{batch_tree_encoder_forward.2} parent=5 // pred_fallthru
      _
    %p255 = scmp.le.s32.totalorder 2, %s9
    // Predicated region
    $region37: #{batch_tree_encoder_forward.2} parent=5 // pred_check
      %p256 = pneg %p255
    $region38: #{batch_tree_encoder_forward.2} parent=5 // pred_check_branch
      %258 = sbr.rel (%p256) target = $region40
    $region39: #{batch_tree_encoder_forward.2} parent=5 // pred_region
      %s259 = ssub.s32 %s9, 2
      // Predicated region
      $region41: #{batch_tree_encoder_forward.2} parent=39 // pred_check
        %p260 = pneg %p106
      $region42: #{batch_tree_encoder_forward.2} parent=39 // pred_check_branch
        %262 = sbr.rel (%p260) target = $region44
      $region43: #{batch_tree_encoder_forward.2} parent=39 // pred_region
        %p263 = scmp.lt.s32.totalorder %s15, 4
        %s264 = scalar_select %p263, %s15, 4
        %s265 = smul.addr %s264, 8
        %s266 = scalar_lea.vmem %s3, %s265
      $region44: #{batch_tree_encoder_forward.2} parent=39 // pred_fallthru
        _
    $region40: #{batch_tree_encoder_forward.2} parent=5 // pred_fallthru
      _
  $region6: #{batch_tree_encoder_forward.2} parent=0 // loop_footer
    %s13 = sadd.s32 1, %s9
  $region7: #{batch_tree_encoder_forward.2} parent=0 // loop_footer_branch
    %8 = sbr.rel target = $region3
  $region8: #{batch_tree_encoder_forward.2} parent=0 // loop_exit
    _

// kernel: batch_tree_encoder_forward.3
$region0: #{batch_tree_encoder_forward.3}
  #allocation0 [shape = 'u32[]', space=smem, size = 0x4, offset = 0x4, fixed_abs, tag = 'smem constant byte address 0x4 - core index']
  #allocation1 [shape = 'u32[144,128]{1,0:T(1,128)}', space=vmem, size = 0x12000, scoped, tag = 'internal scratch']
  #allocation2 [shape = 'f32[16,128]{1,0:T(8,128)}', space=vmem, size = 0x2000, scoped, tag = 'scratch operand']
  #allocation3 [shape = 's32[16]{0}', space=sflag, size = 0x40, scoped, tag = 'scratch operand']
  #allocation8 [shape = 's32[]', space=sflag, size = 0x4, offset = 0, fixed_abs, tag = 'sflag constant byte address 0x0 - dummy sync flag']
  #allocation9 [shape = 's32[]', space=sflag, size = 0x4, offset = 0, fixed_abs, tag = 'sflag constant byte address 0x0 - dummy sync flag']
  #allocation10 [shape = 's32[]', space=sflag, size = 0x4, offset = 0, fixed_abs, tag = 'sflag constant byte address 0x0 - dummy sync flag']
  #allocation11 [shape = 's32[]', space=sflag, size = 0x4, offset = 0, fixed_abs, tag = 'sflag constant byte address 0x0 - dummy sync flag']
  #allocation12 [shape = 's32[]', space=sflag, size = 0x4, offset = 0, fixed_abs, tag = 'sflag constant byte address 0x0 - dummy sync flag']
  #allocation13 [shape = 's32[]', space=sflag, size = 0x4, offset = 0, fixed_abs, tag = 'sflag constant byte address 0x0 - dummy sync flag']
  #allocation14 [shape = 's32[]', space=sflag, size = 0x4, offset = 0, fixed_abs, tag = 'sflag constant byte address 0x0 - dummy sync flag']
  #allocation15 [shape = 's32[]', space=sflag, size = 0x4, offset = 0, fixed_abs, tag = 'sflag constant byte address 0x0 - dummy sync flag']
  #allocation16 [shape = 's32[]', space=sflag, size = 0x4, offset = 0, fixed_abs, tag = 'sflag constant byte address 0x0 - dummy sync flag']
  #allocation17 [shape = 's32[]', space=sflag, size = 0x4, offset = 0, fixed_abs, tag = 'sflag constant byte address 0x0 - dummy sync flag']
  #allocation18 [shape = 's32[]', space=sflag, size = 0x4, offset = 0, fixed_abs, tag = 'sflag constant byte address 0x0 - dummy sync flag']
  #allocation19 [shape = 's32[]', space=sflag, size = 0x4, offset = 0, fixed_abs, tag = 'sflag constant byte address 0x0 - dummy sync flag']
  #allocation20 [shape = 's32[]', space=sflag, size = 0x4, offset = 0, fixed_abs, tag = 'sflag constant byte address 0x0 - dummy sync flag']
  #allocation21 [shape = 's32[]', space=sflag, size = 0x4, offset = 0, fixed_abs, tag = 'sflag constant byte address 0x0 - dummy sync flag']
  #allocation22 [shape = 's32[]', space=sflag, size = 0x4, offset = 0, fixed_abs, tag = 'sflag constant byte address 0x0 - dummy sync flag']
  #allocation23 [shape = 's32[]', space=sflag, size = 0x4, offset = 0, fixed_abs, tag = 'sflag constant byte address 0x0 - dummy sync flag']
  %s0 = inlined_call_operand.vmem [shape: s32[2,8], index: 0, kind: input, shape index: {}]
  %s1 = inlined_call_operand.vmem [shape: f32[40,128], index: 1, kind: input, shape index: {}]
  %s2 = inlined_call_operand.hbm [shape: f32[2,128], index: 2, kind: output, shape index: {}]
  %s3 = sld [smem:[#allocation0]]
  $region498: #{batch_tree_encoder_forward.3} parent=0
    _
  %s5 = ssub.s32 1, %s3
  %s6 = scalar_select 0, %s5, %s3
  $region1: #{batch_tree_encoder_forward.3} parent=0
    #allocation4 [shape = 'u8[1024]{0}', space=smem, size = 0x400, scoped, tag = 'input window, operand 0, single buffered']
    #allocation5 [shape = 's32[1]{0}', space=sflag, size = 0x4, scoped, tag = 'scoped memory for batch_tree_encoder_forward.3']
    #allocation6 [shape = 's32[1]{0}', space=sflag, size = 0x4, scoped, tag = 'scoped memory for batch_tree_encoder_forward.3']
    #allocation7 [shape = 'u8[1024]{0}', space=vmem, size = 0x400, scoped, tag = 'output window, operand 0, single buffered']
    %7 = vsyncpa [#allocation6], 0
    %8 = vsyncpa [#allocation5], 0
    // Predicated region
    $region2: #{batch_tree_encoder_forward.3} parent=1 // pred_check
      _
    $region3: #{batch_tree_encoder_forward.3} parent=1 // pred_check_branch
      %10 = sbr.rel (0) target = $region5
    $region4: #{batch_tree_encoder_forward.3} parent=1 // pred_region
      %s12 = ssub.s32 32, 32
      %13 = vsyncadd [#allocation6], %s12
      %s15 = sshll.u32 %s0, 4
      %s16 = int_to_ptr.vmem [resolvable:$true] %s15
      %18 = dma.vmem_to_smem %s16, 32, [#allocation4], [#allocation6]
    $region5: #{batch_tree_encoder_forward.3} parent=1 // pred_fallthru
      _
    // Predicated region
    $region6: #{batch_tree_encoder_forward.3} parent=1 // pred_check
      _
    $region7: #{batch_tree_encoder_forward.3} parent=1 // pred_check_branch
      %20 = sbr.rel (0) target = $region9
    $region8: #{batch_tree_encoder_forward.3} parent=1 // pred_region
      %21 = dma.done [#allocation6], 32
    $region9: #{batch_tree_encoder_forward.3} parent=1 // pred_fallthru
      _
    %22 = sfence
    %s23 = sld [smem:[#allocation4]]
    %s24 = scalar_lea.vmem %s1, %s23
    %p26 = scmp.lt.u32.totalorder 1, 8
    %p27 = pneg %p26
    // Predicated region
    $region10: #{batch_tree_encoder_forward.3} parent=1 // pred_check
      _
    $region11: #{batch_tree_encoder_forward.3} parent=1 // pred_check_branch
      %29 = sbr.rel (%p26) target = $region13
    $region12: #{batch_tree_encoder_forward.3} parent=1 // pred_region
      %s44 = sand.u32 1, 7
      %p45 = scmp.eq.s32.totalorder %s44, 0
      %p46 = pneg %p45
      // Predicated region
      $region25: #{batch_tree_encoder_forward.3} parent=12 // pred_check
        _
      $region26: #{batch_tree_encoder_forward.3} parent=12 // pred_check_branch
        %48 = sbr.rel (%p45) target = $region28
      $region27: #{batch_tree_encoder_forward.3} parent=12 // pred_region
        %s49 = sand.u32 1, 7
        %s50 = ssub.s32 1, %s49
        %s51 = scalar_lea.vmem %s24, %s50
        %s52 = ssub.s32 1, %s49
        %s53 = scalar_lea.vmem [#allocation2], %s52
        %s54 = sshllo.u32 0, %s49
        loop: start=0, step=1, limit=1
        $region29: #{batch_tree_encoder_forward.3} parent=27 // loop_pre_header
          _
        $region30: #{batch_tree_encoder_forward.3} parent=27 // loop_header
          %s56 = sphi 0, %s60
          %p57 = scmp.ge.s32.totalorder %s56, 1
          %s61 = sphi %s51, %s51
          %s62 = sphi %s53, %s53
        $region31: #{batch_tree_encoder_forward.3} parent=27 // loop_header_branch
          %59 = sbr.rel (%p57) target = $region35
        $region32: #{batch_tree_encoder_forward.3} parent=27 // loop_body
          %v63 = vld [vmem:[%s61] sm:%s54]
          %64 = vst [vmem:[%s62] sm:%s54] %v63
        $region33: #{batch_tree_encoder_forward.3} parent=27 // loop_footer
          %s60 = sadd.s32 1, %s56
        $region34: #{batch_tree_encoder_forward.3} parent=27 // loop_footer_branch
          %55 = sbr.rel target = $region30
        $region35: #{batch_tree_encoder_forward.3} parent=27 // loop_exit
          _
      $region28: #{batch_tree_encoder_forward.3} parent=12 // pred_fallthru
        _
    $region13: #{batch_tree_encoder_forward.3} parent=1 // pred_fallthru
      _
    // Predicated region
    $region14: #{batch_tree_encoder_forward.3} parent=1 // pred_check
      %p30 = pneg %p26
    $region15: #{batch_tree_encoder_forward.3} parent=1 // pred_check_branch
      %32 = sbr.rel (%p30) target = $region17
    $region16: #{batch_tree_encoder_forward.3} parent=1 // pred_region
      %s33 = sshllo.u32 0, 1
      loop: start=0, step=1, limit=1
      $region18: #{batch_tree_encoder_forward.3} parent=16 // loop_pre_header
        _
      $region19: #{batch_tree_encoder_forward.3} parent=16 // loop_header
        %s35 = sphi 0, %s39
        %p36 = scmp.ge.s32.totalorder %s35, 1
        %s40 = sphi %s24, %s24
        %s41 = sphi [#allocation2], [#allocation2]
      $region20: #{batch_tree_encoder_forward.3} parent=16 // loop_header_branch
        %38 = sbr.rel (%p36) target = $region24
      $region21: #{batch_tree_encoder_forward.3} parent=16 // loop_body
        %v42 = vld [vmem:[%s40] sm:%s33]
        %43 = vst [vmem:[%s41] sm:%s33] %v42
      $region22: #{batch_tree_encoder_forward.3} parent=16 // loop_footer
        %s39 = sadd.s32 1, %s35
      $region23: #{batch_tree_encoder_forward.3} parent=16 // loop_footer_branch
        %34 = sbr.rel target = $region19
      $region24: #{batch_tree_encoder_forward.3} parent=16 // loop_exit
        _
    $region17: #{batch_tree_encoder_forward.3} parent=1 // pred_fallthru
      _
    // Predicated region
    $region36: #{batch_tree_encoder_forward.3} parent=1 // pred_check
      _
    $region37: #{batch_tree_encoder_forward.3} parent=1 // pred_check_branch
      %67 = sbr.rel (0) target = $region39
    $region38: #{batch_tree_encoder_forward.3} parent=1 // pred_region
      %68 = vsyncadd [#allocation3], 16
    $region39: #{batch_tree_encoder_forward.3} parent=1 // pred_fallthru
      _
    %s69 = sld [smem:[#allocation4 + $0x1]]
    %s70 = scalar_lea.vmem %s1, %s69
    %s71 = scalar_lea.vmem [#allocation2], 1
    %s72 = scalar_lea.sflag [#allocation3], 1
    %p74 = scmp.lt.u32.totalorder 1, 8
    %p75 = pneg %p74
    // Predicated region
    $region40: #{batch_tree_encoder_forward.3} parent=1 // pred_check
      _
    $region41: #{batch_tree_encoder_forward.3} parent=1 // pred_check_branch
      %77 = sbr.rel (%p74) target = $region43
    $region42: #{batch_tree_encoder_forward.3} parent=1 // pred_region
      %s92 = sand.u32 1, 7
      %p93 = scmp.eq.s32.totalorder %s92, 0
      %p94 = pneg %p93
      // Predicated region
      $region55: #{batch_tree_encoder_forward.3} parent=42 // pred_check
        _
      $region56: #{batch_tree_encoder_forward.3} parent=42 // pred_check_branch
        %96 = sbr.rel (%p93) target = $region58
      $region57: #{batch_tree_encoder_forward.3} parent=42 // pred_region
        %s97 = sand.u32 1, 7
        %s98 = ssub.s32 1, %s97
        %s99 = scalar_lea.vmem %s70, %s98
        %s100 = ssub.s32 1, %s97
        %s101 = scalar_lea.vmem %s71, %s100 [#allocation2]
        %s102 = sshllo.u32 0, %s97
        loop: start=0, step=1, limit=1
        $region59: #{batch_tree_encoder_forward.3} parent=57 // loop_pre_header
          _
        $region60: #{batch_tree_encoder_forward.3} parent=57 // loop_header
          %s104 = sphi 0, %s108
          %p105 = scmp.ge.s32.totalorder %s104, 1
          %s109 = sphi %s99, %s99
          %s110 = sphi %s101, %s101
        $region61: #{batch_tree_encoder_forward.3} parent=57 // loop_header_branch
          %107 = sbr.rel (%p105) target = $region65
        $region62: #{batch_tree_encoder_forward.3} parent=57 // loop_body
          %v111 = vld [vmem:[%s109] sm:%s102]
          %112 = vst [vmem:[%s110] sm:%s102] %v111
        $region63: #{batch_tree_encoder_forward.3} parent=57 // loop_footer
          %s108 = sadd.s32 1, %s104
        $region64: #{batch_tree_encoder_forward.3} parent=57 // loop_footer_branch
          %103 = sbr.rel target = $region60
        $region65: #{batch_tree_encoder_forward.3} parent=57 // loop_exit
          _
      $region58: #{batch_tree_encoder_forward.3} parent=42 // pred_fallthru
        _
    $region43: #{batch_tree_encoder_forward.3} parent=1 // pred_fallthru
      _
    // Predicated region
    $region44: #{batch_tree_encoder_forward.3} parent=1 // pred_check
      %p78 = pneg %p74
    $region45: #{batch_tree_encoder_forward.3} parent=1 // pred_check_branch
      %80 = sbr.rel (%p78) target = $region47
    $region46: #{batch_tree_encoder_forward.3} parent=1 // pred_region
      %s81 = sshllo.u32 0, 1
      loop: start=0, step=1, limit=1
      $region48: #{batch_tree_encoder_forward.3} parent=46 // loop_pre_header
        _
      $region49: #{batch_tree_encoder_forward.3} parent=46 // loop_header
        %s83 = sphi 0, %s87
        %p84 = scmp.ge.s32.totalorder %s83, 1
        %s88 = sphi %s70, %s70
        %s89 = sphi %s71, %s71
      $region50: #{batch_tree_encoder_forward.3} parent=46 // loop_header_branch
        %86 = sbr.rel (%p84) target = $region54
      $region51: #{batch_tree_encoder_forward.3} parent=46 // loop_body
        %v90 = vld [vmem:[%s88] sm:%s81]
        %91 = vst [vmem:[%s89] sm:%s81] %v90
      $region52: #{batch_tree_encoder_forward.3} parent=46 // loop_footer
        %s87 = sadd.s32 1, %s83
      $region53: #{batch_tree_encoder_forward.3} parent=46 // loop_footer_branch
        %82 = sbr.rel target = $region49
      $region54: #{batch_tree_encoder_forward.3} parent=46 // loop_exit
        _
    $region47: #{batch_tree_encoder_forward.3} parent=1 // pred_fallthru
      _
    // Predicated region
    $region66: #{batch_tree_encoder_forward.3} parent=1 // pred_check
      _
    $region67: #{batch_tree_encoder_forward.3} parent=1 // pred_check_branch
      %115 = sbr.rel (0) target = $region69
    $region68: #{batch_tree_encoder_forward.3} parent=1 // pred_region
      %116 = vsyncadd %s72, 16
    $region69: #{batch_tree_encoder_forward.3} parent=1 // pred_fallthru
      _
    %s117 = sld [smem:[#allocation4 + $0x2]]
    %s118 = scalar_lea.vmem %s1, %s117
    %s119 = scalar_lea.vmem [#allocation2], 2
    %s120 = scalar_lea.sflag [#allocation3], 2
    %p122 = scmp.lt.u32.totalorder 1, 8
    %p123 = pneg %p122
    // Predicated region
    $region70: #{batch_tree_encoder_forward.3} parent=1 // pred_check
      _
    $region71: #{batch_tree_encoder_forward.3} parent=1 // pred_check_branch
      %125 = sbr.rel (%p122) target = $region73
    $region72: #{batch_tree_encoder_forward.3} parent=1 // pred_region
      %s140 = sand.u32 1, 7
      %p141 = scmp.eq.s32.totalorder %s140, 0
      %p142 = pneg %p141
      // Predicated region
      $region85: #{batch_tree_encoder_forward.3} parent=72 // pred_check
        _
      $region86: #{batch_tree_encoder_forward.3} parent=72 // pred_check_branch
        %144 = sbr.rel (%p141) target = $region88
      $region87: #{batch_tree_encoder_forward.3} parent=72 // pred_region
        %s145 = sand.u32 1, 7
        %s146 = ssub.s32 1, %s145
        %s147 = scalar_lea.vmem %s118, %s146
        %s148 = ssub.s32 1, %s145
        %s149 = scalar_lea.vmem %s119, %s148 [#allocation2]
        %s150 = sshllo.u32 0, %s145
        loop: start=0, step=1, limit=1
        $region89: #{batch_tree_encoder_forward.3} parent=87 // loop_pre_header
          _
        $region90: #{batch_tree_encoder_forward.3} parent=87 // loop_header
          %s152 = sphi 0, %s156
          %p153 = scmp.ge.s32.totalorder %s152, 1
          %s157 = sphi %s147, %s147
          %s158 = sphi %s149, %s149
        $region91: #{batch_tree_encoder_forward.3} parent=87 // loop_header_branch
          %155 = sbr.rel (%p153) target = $region95
        $region92: #{batch_tree_encoder_forward.3} parent=87 // loop_body
          %v159 = vld [vmem:[%s157] sm:%s150]
          %160 = vst [vmem:[%s158] sm:%s150] %v159
        $region93: #{batch_tree_encoder_forward.3} parent=87 // loop_footer
          %s156 = sadd.s32 1, %s152
        $region94: #{batch_tree_encoder_forward.3} parent=87 // loop_footer_branch
          %151 = sbr.rel target = $region90
        $region95: #{batch_tree_encoder_forward.3} parent=87 // loop_exit
          _
      $region88: #{batch_tree_encoder_forward.3} parent=72 // pred_fallthru
        _
    $region73: #{batch_tree_encoder_forward.3} parent=1 // pred_fallthru
      _
    // Predicated region
    $region74: #{batch_tree_encoder_forward.3} parent=1 // pred_check
      %p126 = pneg %p122
    $region75: #{batch_tree_encoder_forward.3} parent=1 // pred_check_branch
      %128 = sbr.rel (%p126) target = $region77
    $region76: #{batch_tree_encoder_forward.3} parent=1 // pred_region
      %s129 = sshllo.u32 0, 1
      loop: start=0, step=1, limit=1
      $region78: #{batch_tree_encoder_forward.3} parent=76 // loop_pre_header
        _
      $region79: #{batch_tree_encoder_forward.3} parent=76 // loop_header
        %s131 = sphi 0, %s135
        %p132 = scmp.ge.s32.totalorder %s131, 1
        %s136 = sphi %s118, %s118
        %s137 = sphi %s119, %s119
      $region80: #{batch_tree_encoder_forward.3} parent=76 // loop_header_branch
        %134 = sbr.rel (%p132) target = $region84
      $region81: #{batch_tree_encoder_forward.3} parent=76 // loop_body
        %v138 = vld [vmem:[%s136] sm:%s129]
        %139 = vst [vmem:[%s137] sm:%s129] %v138
      $region82: #{batch_tree_encoder_forward.3} parent=76 // loop_footer
        %s135 = sadd.s32 1, %s131
      $region83: #{batch_tree_encoder_forward.3} parent=76 // loop_footer_branch
        %130 = sbr.rel target = $region79
      $region84: #{batch_tree_encoder_forward.3} parent=76 // loop_exit
        _
    $region77: #{batch_tree_encoder_forward.3} parent=1 // pred_fallthru
      _
    // Predicated region
    $region96: #{batch_tree_encoder_forward.3} parent=1 // pred_check
      _
    $region97: #{batch_tree_encoder_forward.3} parent=1 // pred_check_branch
      %163 = sbr.rel (0) target = $region99
    $region98: #{batch_tree_encoder_forward.3} parent=1 // pred_region
      %164 = vsyncadd %s120, 16
    $region99: #{batch_tree_encoder_forward.3} parent=1 // pred_fallthru
      _
    %s165 = sld [smem:[#allocation4 + $0x3]]
    %s166 = scalar_lea.vmem %s1, %s165
    %s167 = scalar_lea.vmem [#allocation2], 3
    %s168 = scalar_lea.sflag [#allocation3], 3
    %p170 = scmp.lt.u32.totalorder 1, 8
    %p171 = pneg %p170
    // Predicated region
    $region100: #{batch_tree_encoder_forward.3} parent=1 // pred_check
      _
    $region101: #{batch_tree_encoder_forward.3} parent=1 // pred_check_branch
      %173 = sbr.rel (%p170) target = $region103
    $region102: #{batch_tree_encoder_forward.3} parent=1 // pred_region
      %s188 = sand.u32 1, 7
      %p189 = scmp.eq.s32.totalorder %s188, 0
      %p190 = pneg %p189
      // Predicated region
      $region115: #{batch_tree_encoder_forward.3} parent=102 // pred_check
        _
      $region116: #{batch_tree_encoder_forward.3} parent=102 // pred_check_branch
        %192 = sbr.rel (%p189) target = $region118
      $region117: #{batch_tree_encoder_forward.3} parent=102 // pred_region
        %s193 = sand.u32 1, 7
        %s194 = ssub.s32 1, %s193
        %s195 = scalar_lea.vmem %s166, %s194
        %s196 = ssub.s32 1, %s193
        %s197 = scalar_lea.vmem %s167, %s196 [#allocation2]
        %s198 = sshllo.u32 0, %s193
        loop: start=0, step=1, limit=1
        $region119: #{batch_tree_encoder_forward.3} parent=117 // loop_pre_header
          _
        $region120: #{batch_tree_encoder_forward.3} parent=117 // loop_header
          %s200 = sphi 0, %s204
          %p201 = scmp.ge.s32.totalorder %s200, 1
          %s205 = sphi %s195, %s195
          %s206 = sphi %s197, %s197
        $region121: #{batch_tree_encoder_forward.3} parent=117 // loop_header_branch
          %203 = sbr.rel (%p201) target = $region125
        $region122: #{batch_tree_encoder_forward.3} parent=117 // loop_body
          %v207 = vld [vmem:[%s205] sm:%s198]
          %208 = vst [vmem:[%s206] sm:%s198] %v207
        $region123: #{batch_tree_encoder_forward.3} parent=117 // loop_footer
          %s204 = sadd.s32 1, %s200
        $region124: #{batch_tree_encoder_forward.3} parent=117 // loop_footer_branch
          %199 = sbr.rel target = $region120
        $region125: #{batch_tree_encoder_forward.3} parent=117 // loop_exit
          _
      $region118: #{batch_tree_encoder_forward.3} parent=102 // pred_fallthru
        _
    $region103: #{batch_tree_encoder_forward.3} parent=1 // pred_fallthru
      _
    // Predicated region
    $region104: #{batch_tree_encoder_forward.3} parent=1 // pred_check
      %p174 = pneg %p170
    $region105: #{batch_tree_encoder_forward.3} parent=1 // pred_check_branch
      %176 = sbr.rel (%p174) target = $region107
    $region106: #{batch_tree_encoder_forward.3} parent=1 // pred_region
      %s177 = sshllo.u32 0, 1
      loop: start=0, step=1, limit=1
      $region108: #{batch_tree_encoder_forward.3} parent=106 // loop_pre_header
        _
      $region109: #{batch_tree_encoder_forward.3} parent=106 // loop_header
        %s179 = sphi 0, %s183
        %p180 = scmp.ge.s32.totalorder %s179, 1
        %s184 = sphi %s166, %s166
        %s185 = sphi %s167, %s167
      $region110: #{batch_tree_encoder_forward.3} parent=106 // loop_header_branch
        %182 = sbr.rel (%p180) target = $region114
      $region111: #{batch_tree_encoder_forward.3} parent=106 // loop_body
        %v186 = vld [vmem:[%s184] sm:%s177]
        %187 = vst [vmem:[%s185] sm:%s177] %v186
      $region112: #{batch_tree_encoder_forward.3} parent=106 // loop_footer
        %s183 = sadd.s32 1, %s179
      $region113: #{batch_tree_encoder_forward.3} parent=106 // loop_footer_branch
        %178 = sbr.rel target = $region109
      $region114: #{batch_tree_encoder_forward.3} parent=106 // loop_exit
        _
    $region107: #{batch_tree_encoder_forward.3} parent=1 // pred_fallthru
      _
    // Predicated region
    $region126: #{batch_tree_encoder_forward.3} parent=1 // pred_check
      _
    $region127: #{batch_tree_encoder_forward.3} parent=1 // pred_check_branch
      %211 = sbr.rel (0) target = $region129
    $region128: #{batch_tree_encoder_forward.3} parent=1 // pred_region
      %212 = vsyncadd %s168, 16
    $region129: #{batch_tree_encoder_forward.3} parent=1 // pred_fallthru
      _
    %s213 = sld [smem:[#allocation4 + $0x4]]
    %s214 = scalar_lea.vmem %s1, %s213
    %s215 = scalar_lea.vmem [#allocation2], 4
    %s216 = scalar_lea.sflag [#allocation3], 4
    %p218 = scmp.lt.u32.totalorder 1, 8
    %p219 = pneg %p218
    // Predicated region
    $region130: #{batch_tree_encoder_forward.3} parent=1 // pred_check
      _
    $region131: #{batch_tree_encoder_forward.3} parent=1 // pred_check_branch
      %221 = sbr.rel (%p218) target = $region133
    $region132: #{batch_tree_encoder_forward.3} parent=1 // pred_region
      %s236 = sand.u32 1, 7
      %p237 = scmp.eq.s32.totalorder %s236, 0
      %p238 = pneg %p237
      // Predicated region
      $region145: #{batch_tree_encoder_forward.3} parent=132 // pred_check
        _
      $region146: #{batch_tree_encoder_forward.3} parent=132 // pred_check_branch
        %240 = sbr.rel (%p237) target = $region148
      $region147: #{batch_tree_encoder_forward.3} parent=132 // pred_region
        %s241 = sand.u32 1, 7
        %s242 = ssub.s32 1, %s241
        %s243 = scalar_lea.vmem %s214, %s242
        %s244 = ssub.s32 1, %s241
        %s245 = scalar_lea.vmem %s215, %s244 [#allocation2]
        %s246 = sshllo.u32 0, %s241
        loop: start=0, step=1, limit=1
        $region149: #{batch_tree_encoder_forward.3} parent=147 // loop_pre_header
          _
        $region150: #{batch_tree_encoder_forward.3} parent=147 // loop_header
          %s248 = sphi 0, %s252
          %p249 = scmp.ge.s32.totalorder %s248, 1
          %s253 = sphi %s243, %s243
          %s254 = sphi %s245, %s245
        $region151: #{batch_tree_encoder_forward.3} parent=147 // loop_header_branch
          %251 = sbr.rel (%p249) target = $region155
        $region152: #{batch_tree_encoder_forward.3} parent=147 // loop_body
          %v255 = vld [vmem:[%s253] sm:%s246]
          %256 = vst [vmem:[%s254] sm:%s246] %v255
        $region153: #{batch_tree_encoder_forward.3} parent=147 // loop_footer
          %s252 = sadd.s32 1, %s248
        $region154: #{batch_tree_encoder_forward.3} parent=147 // loop_footer_branch
          %247 = sbr.rel target = $region150
        $region155: #{batch_tree_encoder_forward.3} parent=147 // loop_exit
          _
      $region148: #{batch_tree_encoder_forward.3} parent=132 // pred_fallthru
        _
    $region133: #{batch_tree_encoder_forward.3} parent=1 // pred_fallthru
      _
    // Predicated region
    $region134: #{batch_tree_encoder_forward.3} parent=1 // pred_check
      %p222 = pneg %p218
    $region135: #{batch_tree_encoder_forward.3} parent=1 // pred_check_branch
      %224 = sbr.rel (%p222) target = $region137
    $region136: #{batch_tree_encoder_forward.3} parent=1 // pred_region
      %s225 = sshllo.u32 0, 1
      loop: start=0, step=1, limit=1
      $region138: #{batch_tree_encoder_forward.3} parent=136 // loop_pre_header
        _
      $region139: #{batch_tree_encoder_forward.3} parent=136 // loop_header
        %s227 = sphi 0, %s231
        %p228 = scmp.ge.s32.totalorder %s227, 1
        %s232 = sphi %s214, %s214
        %s233 = sphi %s215, %s215
      $region140: #{batch_tree_encoder_forward.3} parent=136 // loop_header_branch
        %230 = sbr.rel (%p228) target = $region144
      $region141: #{batch_tree_encoder_forward.3} parent=136 // loop_body
        %v234 = vld [vmem:[%s232] sm:%s225]
        %235 = vst [vmem:[%s233] sm:%s225] %v234
      $region142: #{batch_tree_encoder_forward.3} parent=136 // loop_footer
        %s231 = sadd.s32 1, %s227
      $region143: #{batch_tree_encoder_forward.3} parent=136 // loop_footer_branch
        %226 = sbr.rel target = $region139
      $region144: #{batch_tree_encoder_forward.3} parent=136 // loop_exit
        _
    $region137: #{batch_tree_encoder_forward.3} parent=1 // pred_fallthru
      _
    // Predicated region
    $region156: #{batch_tree_encoder_forward.3} parent=1 // pred_check
      _
    $region157: #{batch_tree_encoder_forward.3} parent=1 // pred_check_branch
      %259 = sbr.rel (0) target = $region159
    $region158: #{batch_tree_encoder_forward.3} parent=1 // pred_region
      %260 = vsyncadd %s216, 16
    $region159: #{batch_tree_encoder_forward.3} parent=1 // pred_fallthru
      _
    %s261 = sld [smem:[#allocation4 + $0x5]]
    %s262 = scalar_lea.vmem %s1, %s261
    %s263 = scalar_lea.vmem [#allocation2], 5
    %s264 = scalar_lea.sflag [#allocation3], 5
    %p266 = scmp.lt.u32.totalorder 1, 8
    %p267 = pneg %p266
    // Predicated region
    $region160: #{batch_tree_encoder_forward.3} parent=1 // pred_check
      _
    $region161: #{batch_tree_encoder_forward.3} parent=1 // pred_check_branch
      %269 = sbr.rel (%p266) target = $region163
    $region162: #{batch_tree_encoder_forward.3} parent=1 // pred_region
      %s284 = sand.u32 1, 7
      %p285 = scmp.eq.s32.totalorder %s284, 0
      %p286 = pneg %p285
      // Predicated region
      $region175: #{batch_tree_encoder_forward.3} parent=162 // pred_check
        _
      $region176: #{batch_tree_encoder_forward.3} parent=162 // pred_check_branch
        %288 = sbr.rel (%p285) target = $region178
      $region177: #{batch_tree_encoder_forward.3} parent=162 // pred_region
        %s289 = sand.u32 1, 7
        %s290 = ssub.s32 1, %s289
        %s291 = scalar_lea.vmem %s262, %s290
        %s292 = ssub.s32 1, %s289
        %s293 = scalar_lea.vmem %s263, %s292 [#allocation2]
        %s294 = sshllo.u32 0, %s289
        loop: start=0, step=1, limit=1
        $region179: #{batch_tree_encoder_forward.3} parent=177 // loop_pre_header
          _
        $region180: #{batch_tree_encoder_forward.3} parent=177 // loop_header
          %s296 = sphi 0, %s300
          %p297 = scmp.ge.s32.totalorder %s296, 1
          %s301 = sphi %s291, %s291
          %s302 = sphi %s293, %s293
        $region181: #{batch_tree_encoder_forward.3} parent=177 // loop_header_branch
          %299 = sbr.rel (%p297) target = $region185
        $region182: #{batch_tree_encoder_forward.3} parent=177 // loop_body
          %v303 = vld [vmem:[%s301] sm:%s294]
          %304 = vst [vmem:[%s302] sm:%s294] %v303
        $region183: #{batch_tree_encoder_forward.3} parent=177 // loop_footer
          %s300 = sadd.s32 1, %s296
        $region184: #{batch_tree_encoder_forward.3} parent=177 // loop_footer_branch
          %295 = sbr.rel target = $region180
        $region185: #{batch_tree_encoder_forward.3} parent=177 // loop_exit
          _
      $region178: #{batch_tree_encoder_forward.3} parent=162 // pred_fallthru
        _
    $region163: #{batch_tree_encoder_forward.3} parent=1 // pred_fallthru
      _
    // Predicated region
    $region164: #{batch_tree_encoder_forward.3} parent=1 // pred_check
      %p270 = pneg %p266
    $region165: #{batch_tree_encoder_forward.3} parent=1 // pred_check_branch
      %272 = sbr.rel (%p270) target = $region167
    $region166: #{batch_tree_encoder_forward.3} parent=1 // pred_region
      %s273 = sshllo.u32 0, 1
      loop: start=0, step=1, limit=1
      $region168: #{batch_tree_encoder_forward.3} parent=166 // loop_pre_header
        _
      $region169: #{batch_tree_encoder_forward.3} parent=166 // loop_header
        %s275 = sphi 0, %s279
        %p276 = scmp.ge.s32.totalorder %s275, 1
        %s280 = sphi %s262, %s262
        %s281 = sphi %s263, %s263
      $region170: #{batch_tree_encoder_forward.3} parent=166 // loop_header_branch
        %278 = sbr.rel (%p276) target = $region174
      $region171: #{batch_tree_encoder_forward.3} parent=166 // loop_body
        %v282 = vld [vmem:[%s280] sm:%s273]
        %283 = vst [vmem:[%s281] sm:%s273] %v282
      $region172: #{batch_tree_encoder_forward.3} parent=166 // loop_footer
        %s279 = sadd.s32 1, %s275
      $region173: #{batch_tree_encoder_forward.3} parent=166 // loop_footer_branch
        %274 = sbr.rel target = $region169
      $region174: #{batch_tree_encoder_forward.3} parent=166 // loop_exit
        _
    $region167: #{batch_tree_encoder_forward.3} parent=1 // pred_fallthru
      _
    // Predicated region
    $region186: #{batch_tree_encoder_forward.3} parent=1 // pred_check
      _
    $region187: #{batch_tree_encoder_forward.3} parent=1 // pred_check_branch
      %307 = sbr.rel (0) target = $region189
    $region188: #{batch_tree_encoder_forward.3} parent=1 // pred_region
      %308 = vsyncadd %s264, 16
    $region189: #{batch_tree_encoder_forward.3} parent=1 // pred_fallthru
      _
    %s309 = sld [smem:[#allocation4 + $0x6]]
    %s310 = scalar_lea.vmem %s1, %s309
    %s311 = scalar_lea.vmem [#allocation2], 6
    %s312 = scalar_lea.sflag [#allocation3], 6
    %p314 = scmp.lt.u32.totalorder 1, 8
    %p315 = pneg %p314
    // Predicated region
    $region190: #{batch_tree_encoder_forward.3} parent=1 // pred_check
      _
    $region191: #{batch_tree_encoder_forward.3} parent=1 // pred_check_branch
      %317 = sbr.rel (%p314) target = $region193
    $region192: #{batch_tree_encoder_forward.3} parent=1 // pred_region
      %s332 = sand.u32 1, 7
      %p333 = scmp.eq.s32.totalorder %s332, 0
      %p334 = pneg %p333
      // Predicated region
      $region205: #{batch_tree_encoder_forward.3} parent=192 // pred_check
        _
      $region206: #{batch_tree_encoder_forward.3} parent=192 // pred_check_branch
        %336 = sbr.rel (%p333) target = $region208
      $region207: #{batch_tree_encoder_forward.3} parent=192 // pred_region
        %s337 = sand.u32 1, 7
        %s338 = ssub.s32 1, %s337
        %s339 = scalar_lea.vmem %s310, %s338
        %s340 = ssub.s32 1, %s337
        %s341 = scalar_lea.vmem %s311, %s340 [#allocation2]
        %s342 = sshllo.u32 0, %s337
        loop: start=0, step=1, limit=1
        $region209: #{batch_tree_encoder_forward.3} parent=207 // loop_pre_header
          _
        $region210: #{batch_tree_encoder_forward.3} parent=207 // loop_header
          %s344 = sphi 0, %s348
          %p345 = scmp.ge.s32.totalorder %s344, 1
          %s349 = sphi %s339, %s339
          %s350 = sphi %s341, %s341
        $region211: #{batch_tree_encoder_forward.3} parent=207 // loop_header_branch
          %347 = sbr.rel (%p345) target = $region215
        $region212: #{batch_tree_encoder_forward.3} parent=207 // loop_body
          %v351 = vld [vmem:[%s349] sm:%s342]
          %352 = vst [vmem:[%s350] sm:%s342] %v351
        $region213: #{batch_tree_encoder_forward.3} parent=207 // loop_footer
          %s348 = sadd.s32 1, %s344
        $region214: #{batch_tree_encoder_forward.3} parent=207 // loop_footer_branch
          %343 = sbr.rel target = $region210
        $region215: #{batch_tree_encoder_forward.3} parent=207 // loop_exit
          _
      $region208: #{batch_tree_encoder_forward.3} parent=192 // pred_fallthru
        _
    $region193: #{batch_tree_encoder_forward.3} parent=1 // pred_fallthru
      _
    // Predicated region
    $region194: #{batch_tree_encoder_forward.3} parent=1 // pred_check
      %p318 = pneg %p314
    $region195: #{batch_tree_encoder_forward.3} parent=1 // pred_check_branch
      %320 = sbr.rel (%p318) target = $region197
    $region196: #{batch_tree_encoder_forward.3} parent=1 // pred_region
      %s321 = sshllo.u32 0, 1
      loop: start=0, step=1, limit=1
      $region198: #{batch_tree_encoder_forward.3} parent=196 // loop_pre_header
        _
      $region199: #{batch_tree_encoder_forward.3} parent=196 // loop_header
        %s323 = sphi 0, %s327
        %p324 = scmp.ge.s32.totalorder %s323, 1
        %s328 = sphi %s310, %s310
        %s329 = sphi %s311, %s311
      $region200: #{batch_tree_encoder_forward.3} parent=196 // loop_header_branch
        %326 = sbr.rel (%p324) target = $region204
      $region201: #{batch_tree_encoder_forward.3} parent=196 // loop_body
        %v330 = vld [vmem:[%s328] sm:%s321]
        %331 = vst [vmem:[%s329] sm:%s321] %v330
      $region202: #{batch_tree_encoder_forward.3} parent=196 // loop_footer
        %s327 = sadd.s32 1, %s323
      $region203: #{batch_tree_encoder_forward.3} parent=196 // loop_footer_branch
        %322 = sbr.rel target = $region199
      $region204: #{batch_tree_encoder_forward.3} parent=196 // loop_exit
        _
    $region197: #{batch_tree_encoder_forward.3} parent=1 // pred_fallthru
      _
    // Predicated region
    $region216: #{batch_tree_encoder_forward.3} parent=1 // pred_check
      _
    $region217: #{batch_tree_encoder_forward.3} parent=1 // pred_check_branch
      %355 = sbr.rel (0) target = $region219
    $region218: #{batch_tree_encoder_forward.3} parent=1 // pred_region
      %356 = vsyncadd %s312, 16
    $region219: #{batch_tree_encoder_forward.3} parent=1 // pred_fallthru
      _
    %s357 = sld [smem:[#allocation4 + $0x7]]
    %s358 = scalar_lea.vmem %s1, %s357
    %s359 = scalar_lea.vmem [#allocation2], 7
    %s360 = scalar_lea.sflag [#allocation3], 7
    %p362 = scmp.lt.u32.totalorder 1, 8
    %p363 = pneg %p362
    // Predicated region
    $region220: #{batch_tree_encoder_forward.3} parent=1 // pred_check
      _
    $region221: #{batch_tree_encoder_forward.3} parent=1 // pred_check_branch
      %365 = sbr.rel (%p362) target = $region223
    $region222: #{batch_tree_encoder_forward.3} parent=1 // pred_region
      %s380 = sand.u32 1, 7
      %p381 = scmp.eq.s32.totalorder %s380, 0
      %p382 = pneg %p381
      // Predicated region
      $region235: #{batch_tree_encoder_forward.3} parent=222 // pred_check
        _
      $region236: #{batch_tree_encoder_forward.3} parent=222 // pred_check_branch
        %384 = sbr.rel (%p381) target = $region238
      $region237: #{batch_tree_encoder_forward.3} parent=222 // pred_region
        %s385 = sand.u32 1, 7
        %s386 = ssub.s32 1, %s385
        %s387 = scalar_lea.vmem %s358, %s386
        %s388 = ssub.s32 1, %s385
        %s389 = scalar_lea.vmem %s359, %s388 [#allocation2]
        %s390 = sshllo.u32 0, %s385
        loop: start=0, step=1, limit=1
        $region239: #{batch_tree_encoder_forward.3} parent=237 // loop_pre_header
          _
        $region240: #{batch_tree_encoder_forward.3} parent=237 // loop_header
          %s392 = sphi 0, %s396
          %p393 = scmp.ge.s32.totalorder %s392, 1
          %s397 = sphi %s387, %s387
          %s398 = sphi %s389, %s389
        $region241: #{batch_tree_encoder_forward.3} parent=237 // loop_header_branch
          %395 = sbr.rel (%p393) target = $region245
        $region242: #{batch_tree_encoder_forward.3} parent=237 // loop_body
          %v399 = vld [vmem:[%s397] sm:%s390]
          %400 = vst [vmem:[%s398] sm:%s390] %v399
        $region243: #{batch_tree_encoder_forward.3} parent=237 // loop_footer
          %s396 = sadd.s32 1, %s392
        $region244: #{batch_tree_encoder_forward.3} parent=237 // loop_footer_branch
          %391 = sbr.rel target = $region240
        $region245: #{batch_tree_encoder_forward.3} parent=237 // loop_exit
          _
      $region238: #{batch_tree_encoder_forward.3} parent=222 // pred_fallthru
        _
    $region223: #{batch_tree_encoder_forward.3} parent=1 // pred_fallthru
      _
    // Predicated region
    $region224: #{batch_tree_encoder_forward.3} parent=1 // pred_check
      %p366 = pneg %p362
    $region225: #{batch_tree_encoder_forward.3} parent=1 // pred_check_branch
      %368 = sbr.rel (%p366) target = $region227
    $region226: #{batch_tree_encoder_forward.3} parent=1 // pred_region
      %s369 = sshllo.u32 0, 1
      loop: start=0, step=1, limit=1
      $region228: #{batch_tree_encoder_forward.3} parent=226 // loop_pre_header
        _
      $region229: #{batch_tree_encoder_forward.3} parent=226 // loop_header
        %s371 = sphi 0, %s375
        %p372 = scmp.ge.s32.totalorder %s371, 1
        %s376 = sphi %s358, %s358
        %s377 = sphi %s359, %s359
      $region230: #{batch_tree_encoder_forward.3} parent=226 // loop_header_branch
        %374 = sbr.rel (%p372) target = $region234
      $region231: #{batch_tree_encoder_forward.3} parent=226 // loop_body
        %v378 = vld [vmem:[%s376] sm:%s369]
        %379 = vst [vmem:[%s377] sm:%s369] %v378
      $region232: #{batch_tree_encoder_forward.3} parent=226 // loop_footer
        %s375 = sadd.s32 1, %s371
      $region233: #{batch_tree_encoder_forward.3} parent=226 // loop_footer_branch
        %370 = sbr.rel target = $region229
      $region234: #{batch_tree_encoder_forward.3} parent=226 // loop_exit
        _
    $region227: #{batch_tree_encoder_forward.3} parent=1 // pred_fallthru
      _
    // Predicated region
    $region246: #{batch_tree_encoder_forward.3} parent=1 // pred_check
      _
    $region247: #{batch_tree_encoder_forward.3} parent=1 // pred_check_branch
      %403 = sbr.rel (0) target = $region249
    $region248: #{batch_tree_encoder_forward.3} parent=1 // pred_region
      %404 = vsyncadd %s360, 16
    $region249: #{batch_tree_encoder_forward.3} parent=1 // pred_fallthru
      _
    %s405 = sld [smem:[#allocation4 + $0x80]]
    %s406 = scalar_lea.vmem %s1, %s405
    %s407 = scalar_lea.vmem [#allocation2], 8
    %s408 = scalar_lea.sflag [#allocation3], 8
    %p410 = scmp.lt.u32.totalorder 1, 8
    %p411 = pneg %p410
    // Predicated region
    $region250: #{batch_tree_encoder_forward.3} parent=1 // pred_check
      _
    $region251: #{batch_tree_encoder_forward.3} parent=1 // pred_check_branch
      %413 = sbr.rel (%p410) target = $region253
    $region252: #{batch_tree_encoder_forward.3} parent=1 // pred_region
      %s428 = sand.u32 1, 7
      %p429 = scmp.eq.s32.totalorder %s428, 0
      %p430 = pneg %p429
      // Predicated region
      $region265: #{batch_tree_encoder_forward.3} parent=252 // pred_check
        _
      $region266: #{batch_tree_encoder_forward.3} parent=252 // pred_check_branch
        %432 = sbr.rel (%p429) target = $region268
      $region267: #{batch_tree_encoder_forward.3} parent=252 // pred_region
        %s433 = sand.u32 1, 7
        %s434 = ssub.s32 1, %s433
        %s435 = scalar_lea.vmem %s406, %s434
        %s436 = ssub.s32 1, %s433
        %s437 = scalar_lea.vmem %s407, %s436 [#allocation2]
        %s438 = sshllo.u32 0, %s433
        loop: start=0, step=1, limit=1
        $region269: #{batch_tree_encoder_forward.3} parent=267 // loop_pre_header
          _
        $region270: #{batch_tree_encoder_forward.3} parent=267 // loop_header
          %s440 = sphi 0, %s444
          %p441 = scmp.ge.s32.totalorder %s440, 1
          %s445 = sphi %s435, %s435
          %s446 = sphi %s437, %s437
        $region271: #{batch_tree_encoder_forward.3} parent=267 // loop_header_branch
          %443 = sbr.rel (%p441) target = $region275
        $region272: #{batch_tree_encoder_forward.3} parent=267 // loop_body
          %v447 = vld [vmem:[%s445] sm:%s438]
          %448 = vst [vmem:[%s446] sm:%s438] %v447
        $region273: #{batch_tree_encoder_forward.3} parent=267 // loop_footer
          %s444 = sadd.s32 1, %s440
        $region274: #{batch_tree_encoder_forward.3} parent=267 // loop_footer_branch
          %439 = sbr.rel target = $region270
        $region275: #{batch_tree_encoder_forward.3} parent=267 // loop_exit
          _
      $region268: #{batch_tree_encoder_forward.3} parent=252 // pred_fallthru
        _
    $region253: #{batch_tree_encoder_forward.3} parent=1 // pred_fallthru
      _
    // Predicated region
    $region254: #{batch_tree_encoder_forward.3} parent=1 // pred_check
      %p414 = pneg %p410
    $region255: #{batch_tree_encoder_forward.3} parent=1 // pred_check_branch
      %416 = sbr.rel (%p414) target = $region257
    $region256: #{batch_tree_encoder_forward.3} parent=1 // pred_region
      %s417 = sshllo.u32 0, 1
      loop: start=0, step=1, limit=1
      $region258: #{batch_tree_encoder_forward.3} parent=256 // loop_pre_header
        _
      $region259: #{batch_tree_encoder_forward.3} parent=256 // loop_header
        %s419 = sphi 0, %s423
        %p420 = scmp.ge.s32.totalorder %s419, 1
        %s424 = sphi %s406, %s406
        %s425 = sphi %s407, %s407
      $region260: #{batch_tree_encoder_forward.3} parent=256 // loop_header_branch
        %422 = sbr.rel (%p420) target = $region264
      $region261: #{batch_tree_encoder_forward.3} parent=256 // loop_body
        %v426 = vld [vmem:[%s424] sm:%s417]
        %427 = vst [vmem:[%s425] sm:%s417] %v426
      $region262: #{batch_tree_encoder_forward.3} parent=256 // loop_footer
        %s423 = sadd.s32 1, %s419
      $region263: #{batch_tree_encoder_forward.3} parent=256 // loop_footer_branch
        %418 = sbr.rel target = $region259
      $region264: #{batch_tree_encoder_forward.3} parent=256 // loop_exit
        _
    $region257: #{batch_tree_encoder_forward.3} parent=1 // pred_fallthru
      _
    // Predicated region
    $region276: #{batch_tree_encoder_forward.3} parent=1 // pred_check
      _
    $region277: #{batch_tree_encoder_forward.3} parent=1 // pred_check_branch
      %451 = sbr.rel (0) target = $region279
    $region278: #{batch_tree_encoder_forward.3} parent=1 // pred_region
      %452 = vsyncadd %s408, 16
    $region279: #{batch_tree_encoder_forward.3} parent=1 // pred_fallthru
      _
    %s453 = sld [smem:[#allocation4 + $0x81]]
    %s454 = scalar_lea.vmem %s1, %s453
    %s455 = scalar_lea.vmem [#allocation2], 9
    %s456 = scalar_lea.sflag [#allocation3], 9
    %p458 = scmp.lt.u32.totalorder 1, 8
    %p459 = pneg %p458
    // Predicated region
    $region280: #{batch_tree_encoder_forward.3} parent=1 // pred_check
      _
    $region281: #{batch_tree_encoder_forward.3} parent=1 // pred_check_branch
      %461 = sbr.rel (%p458) target = $region283
    $region282: #{batch_tree_encoder_forward.3} parent=1 // pred_region
      %s476 = sand.u32 1, 7
      %p477 = scmp.eq.s32.totalorder %s476, 0
      %p478 = pneg %p477
      // Predicated region
      $region295: #{batch_tree_encoder_forward.3} parent=282 // pred_check
        _
      $region296: #{batch_tree_encoder_forward.3} parent=282 // pred_check_branch
        %480 = sbr.rel (%p477) target = $region298
      $region297: #{batch_tree_encoder_forward.3} parent=282 // pred_region
        %s481 = sand.u32 1, 7
        %s482 = ssub.s32 1, %s481
        %s483 = scalar_lea.vmem %s454, %s482
        %s484 = ssub.s32 1, %s481
        %s485 = scalar_lea.vmem %s455, %s484 [#allocation2]
        %s486 = sshllo.u32 0, %s481
        loop: start=0, step=1, limit=1
        $region299: #{batch_tree_encoder_forward.3} parent=297 // loop_pre_header
          _
        $region300: #{batch_tree_encoder_forward.3} parent=297 // loop_header
          %s488 = sphi 0, %s492
          %p489 = scmp.ge.s32.totalorder %s488, 1
          %s493 = sphi %s483, %s483
          %s494 = sphi %s485, %s485
        $region301: #{batch_tree_encoder_forward.3} parent=297 // loop_header_branch
          %491 = sbr.rel (%p489) target = $region305
        $region302: #{batch_tree_encoder_forward.3} parent=297 // loop_body
          %v495 = vld [vmem:[%s493] sm:%s486]
          %496 = vst [vmem:[%s494] sm:%s486] %v495
        $region303: #{batch_tree_encoder_forward.3} parent=297 // loop_footer
          %s492 = sadd.s32 1, %s488
        $region304: #{batch_tree_encoder_forward.3} parent=297 // loop_footer_branch
          %487 = sbr.rel target = $region300
        $region305: #{batch_tree_encoder_forward.3} parent=297 // loop_exit
          _
      $region298: #{batch_tree_encoder_forward.3} parent=282 // pred_fallthru
        _
    $region283: #{batch_tree_encoder_forward.3} parent=1 // pred_fallthru
      _
    // Predicated region
    $region284: #{batch_tree_encoder_forward.3} parent=1 // pred_check
      %p462 = pneg %p458
    $region285: #{batch_tree_encoder_forward.3} parent=1 // pred_check_branch
      %464 = sbr.rel (%p462) target = $region287
    $region286: #{batch_tree_encoder_forward.3} parent=1 // pred_region
      %s465 = sshllo.u32 0, 1
      loop: start=0, step=1, limit=1
      $region288: #{batch_tree_encoder_forward.3} parent=286 // loop_pre_header
        _
      $region289: #{batch_tree_encoder_forward.3} parent=286 // loop_header
        %s467 = sphi 0, %s471
        %p468 = scmp.ge.s32.totalorder %s467, 1
        %s472 = sphi %s454, %s454
        %s473 = sphi %s455, %s455
      $region290: #{batch_tree_encoder_forward.3} parent=286 // loop_header_branch
        %470 = sbr.rel (%p468) target = $region294
      $region291: #{batch_tree_encoder_forward.3} parent=286 // loop_body
        %v474 = vld [vmem:[%s472] sm:%s465]
        %475 = vst [vmem:[%s473] sm:%s465] %v474
      $region292: #{batch_tree_encoder_forward.3} parent=286 // loop_footer
        %s471 = sadd.s32 1, %s467
      $region293: #{batch_tree_encoder_forward.3} parent=286 // loop_footer_branch
        %466 = sbr.rel target = $region289
      $region294: #{batch_tree_encoder_forward.3} parent=286 // loop_exit
        _
    $region287: #{batch_tree_encoder_forward.3} parent=1 // pred_fallthru
      _
    // Predicated region
    $region306: #{batch_tree_encoder_forward.3} parent=1 // pred_check
      _
    $region307: #{batch_tree_encoder_forward.3} parent=1 // pred_check_branch
      %499 = sbr.rel (0) target = $region309
    $region308: #{batch_tree_encoder_forward.3} parent=1 // pred_region
      %500 = vsyncadd %s456, 16
    $region309: #{batch_tree_encoder_forward.3} parent=1 // pred_fallthru
      _
    %s501 = sld [smem:[#allocation4 + $0x82]]
    %s502 = scalar_lea.vmem %s1, %s501
    %s503 = scalar_lea.vmem [#allocation2], 10
    %s504 = scalar_lea.sflag [#allocation3], 10
    %p506 = scmp.lt.u32.totalorder 1, 8
    %p507 = pneg %p506
    // Predicated region
    $region310: #{batch_tree_encoder_forward.3} parent=1 // pred_check
      _
    $region311: #{batch_tree_encoder_forward.3} parent=1 // pred_check_branch
      %509 = sbr.rel (%p506) target = $region313
    $region312: #{batch_tree_encoder_forward.3} parent=1 // pred_region
      %s524 = sand.u32 1, 7
      %p525 = scmp.eq.s32.totalorder %s524, 0
      %p526 = pneg %p525
      // Predicated region
      $region325: #{batch_tree_encoder_forward.3} parent=312 // pred_check
        _
      $region326: #{batch_tree_encoder_forward.3} parent=312 // pred_check_branch
        %528 = sbr.rel (%p525) target = $region328
      $region327: #{batch_tree_encoder_forward.3} parent=312 // pred_region
        %s529 = sand.u32 1, 7
        %s530 = ssub.s32 1, %s529
        %s531 = scalar_lea.vmem %s502, %s530
        %s532 = ssub.s32 1, %s529
        %s533 = scalar_lea.vmem %s503, %s532 [#allocation2]
        %s534 = sshllo.u32 0, %s529
        loop: start=0, step=1, limit=1
        $region329: #{batch_tree_encoder_forward.3} parent=327 // loop_pre_header
          _
        $region330: #{batch_tree_encoder_forward.3} parent=327 // loop_header
          %s536 = sphi 0, %s540
          %p537 = scmp.ge.s32.totalorder %s536, 1
          %s541 = sphi %s531, %s531
          %s542 = sphi %s533, %s533
        $region331: #{batch_tree_encoder_forward.3} parent=327 // loop_header_branch
          %539 = sbr.rel (%p537) target = $region335
        $region332: #{batch_tree_encoder_forward.3} parent=327 // loop_body
          %v543 = vld [vmem:[%s541] sm:%s534]
          %544 = vst [vmem:[%s542] sm:%s534] %v543
        $region333: #{batch_tree_encoder_forward.3} parent=327 // loop_footer
          %s540 = sadd.s32 1, %s536
        $region334: #{batch_tree_encoder_forward.3} parent=327 // loop_footer_branch
          %535 = sbr.rel target = $region330
        $region335: #{batch_tree_encoder_forward.3} parent=327 // loop_exit
          _
      $region328: #{batch_tree_encoder_forward.3} parent=312 // pred_fallthru
        _
    $region313: #{batch_tree_encoder_forward.3} parent=1 // pred_fallthru
      _
    // Predicated region
    $region314: #{batch_tree_encoder_forward.3} parent=1 // pred_check
      %p510 = pneg %p506
    $region315: #{batch_tree_encoder_forward.3} parent=1 // pred_check_branch
      %512 = sbr.rel (%p510) target = $region317
    $region316: #{batch_tree_encoder_forward.3} parent=1 // pred_region
      %s513 = sshllo.u32 0, 1
      loop: start=0, step=1, limit=1
      $region318: #{batch_tree_encoder_forward.3} parent=316 // loop_pre_header
        _
      $region319: #{batch_tree_encoder_forward.3} parent=316 // loop_header
        %s515 = sphi 0, %s519
        %p516 = scmp.ge.s32.totalorder %s515, 1
        %s520 = sphi %s502, %s502
        %s521 = sphi %s503, %s503
      $region320: #{batch_tree_encoder_forward.3} parent=316 // loop_header_branch
        %518 = sbr.rel (%p516) target = $region324
      $region321: #{batch_tree_encoder_forward.3} parent=316 // loop_body
        %v522 = vld [vmem:[%s520] sm:%s513]
        %523 = vst [vmem:[%s521] sm:%s513] %v522
      $region322: #{batch_tree_encoder_forward.3} parent=316 // loop_footer
        %s519 = sadd.s32 1, %s515
      $region323: #{batch_tree_encoder_forward.3} parent=316 // loop_footer_branch
        %514 = sbr.rel target = $region319
      $region324: #{batch_tree_encoder_forward.3} parent=316 // loop_exit
        _
    $region317: #{batch_tree_encoder_forward.3} parent=1 // pred_fallthru
      _
    // Predicated region
    $region336: #{batch_tree_encoder_forward.3} parent=1 // pred_check
      _
    $region337: #{batch_tree_encoder_forward.3} parent=1 // pred_check_branch
      %547 = sbr.rel (0) target = $region339
    $region338: #{batch_tree_encoder_forward.3} parent=1 // pred_region
      %548 = vsyncadd %s504, 16
    $region339: #{batch_tree_encoder_forward.3} parent=1 // pred_fallthru
      _
    %s549 = sld [smem:[#allocation4 + $0x83]]
    %s550 = scalar_lea.vmem %s1, %s549
    %s551 = scalar_lea.vmem [#allocation2], 11
    %s552 = scalar_lea.sflag [#allocation3], 11
    %p554 = scmp.lt.u32.totalorder 1, 8
    %p555 = pneg %p554
    // Predicated region
    $region340: #{batch_tree_encoder_forward.3} parent=1 // pred_check
      _
    $region341: #{batch_tree_encoder_forward.3} parent=1 // pred_check_branch
      %557 = sbr.rel (%p554) target = $region343
    $region342: #{batch_tree_encoder_forward.3} parent=1 // pred_region
      %s572 = sand.u32 1, 7
      %p573 = scmp.eq.s32.totalorder %s572, 0
      %p574 = pneg %p573
      // Predicated region
      $region355: #{batch_tree_encoder_forward.3} parent=342 // pred_check
        _
      $region356: #{batch_tree_encoder_forward.3} parent=342 // pred_check_branch
        %576 = sbr.rel (%p573) target = $region358
      $region357: #{batch_tree_encoder_forward.3} parent=342 // pred_region
        %s577 = sand.u32 1, 7
        %s578 = ssub.s32 1, %s577
        %s579 = scalar_lea.vmem %s550, %s578
        %s580 = ssub.s32 1, %s577
        %s581 = scalar_lea.vmem %s551, %s580 [#allocation2]
        %s582 = sshllo.u32 0, %s577
        loop: start=0, step=1, limit=1
        $region359: #{batch_tree_encoder_forward.3} parent=357 // loop_pre_header
          _
        $region360: #{batch_tree_encoder_forward.3} parent=357 // loop_header
          %s584 = sphi 0, %s588
          %p585 = scmp.ge.s32.totalorder %s584, 1
          %s589 = sphi %s579, %s579
          %s590 = sphi %s581, %s581
        $region361: #{batch_tree_encoder_forward.3} parent=357 // loop_header_branch
          %587 = sbr.rel (%p585) target = $region365
        $region362: #{batch_tree_encoder_forward.3} parent=357 // loop_body
          %v591 = vld [vmem:[%s589] sm:%s582]
          %592 = vst [vmem:[%s590] sm:%s582] %v591
        $region363: #{batch_tree_encoder_forward.3} parent=357 // loop_footer
          %s588 = sadd.s32 1, %s584
        $region364: #{batch_tree_encoder_forward.3} parent=357 // loop_footer_branch
          %583 = sbr.rel target = $region360
        $region365: #{batch_tree_encoder_forward.3} parent=357 // loop_exit
          _
      $region358: #{batch_tree_encoder_forward.3} parent=342 // pred_fallthru
        _
    $region343: #{batch_tree_encoder_forward.3} parent=1 // pred_fallthru
      _
    // Predicated region
    $region344: #{batch_tree_encoder_forward.3} parent=1 // pred_check
      %p558 = pneg %p554
    $region345: #{batch_tree_encoder_forward.3} parent=1 // pred_check_branch
      %560 = sbr.rel (%p558) target = $region347
    $region346: #{batch_tree_encoder_forward.3} parent=1 // pred_region
      %s561 = sshllo.u32 0, 1
      loop: start=0, step=1, limit=1
      $region348: #{batch_tree_encoder_forward.3} parent=346 // loop_pre_header
        _
      $region349: #{batch_tree_encoder_forward.3} parent=346 // loop_header
        %s563 = sphi 0, %s567
        %p564 = scmp.ge.s32.totalorder %s563, 1
        %s568 = sphi %s550, %s550
        %s569 = sphi %s551, %s551
      $region350: #{batch_tree_encoder_forward.3} parent=346 // loop_header_branch
        %566 = sbr.rel (%p564) target = $region354
      $region351: #{batch_tree_encoder_forward.3} parent=346 // loop_body
        %v570 = vld [vmem:[%s568] sm:%s561]
        %571 = vst [vmem:[%s569] sm:%s561] %v570
      $region352: #{batch_tree_encoder_forward.3} parent=346 // loop_footer
        %s567 = sadd.s32 1, %s563
      $region353: #{batch_tree_encoder_forward.3} parent=346 // loop_footer_branch
        %562 = sbr.rel target = $region349
      $region354: #{batch_tree_encoder_forward.3} parent=346 // loop_exit
        _
    $region347: #{batch_tree_encoder_forward.3} parent=1 // pred_fallthru
      _
    // Predicated region
    $region366: #{batch_tree_encoder_forward.3} parent=1 // pred_check
      _
    $region367: #{batch_tree_encoder_forward.3} parent=1 // pred_check_branch
      %595 = sbr.rel (0) target = $region369
    $region368: #{batch_tree_encoder_forward.3} parent=1 // pred_region
      %596 = vsyncadd %s552, 16
    $region369: #{batch_tree_encoder_forward.3} parent=1 // pred_fallthru
      _
    %s597 = sld [smem:[#allocation4 + $0x84]]
    %s598 = scalar_lea.vmem %s1, %s597
    %s599 = scalar_lea.vmem [#allocation2], 12
    %s600 = scalar_lea.sflag [#allocation3], 12
    %p602 = scmp.lt.u32.totalorder 1, 8
    %p603 = pneg %p602
    // Predicated region
    $region370: #{batch_tree_encoder_forward.3} parent=1 // pred_check
      _
    $region371: #{batch_tree_encoder_forward.3} parent=1 // pred_check_branch
      %605 = sbr.rel (%p602) target = $region373
    $region372: #{batch_tree_encoder_forward.3} parent=1 // pred_region
      %s620 = sand.u32 1, 7
      %p621 = scmp.eq.s32.totalorder %s620, 0
      %p622 = pneg %p621
      // Predicated region
      $region385: #{batch_tree_encoder_forward.3} parent=372 // pred_check
        _
      $region386: #{batch_tree_encoder_forward.3} parent=372 // pred_check_branch
        %624 = sbr.rel (%p621) target = $region388
      $region387: #{batch_tree_encoder_forward.3} parent=372 // pred_region
        %s625 = sand.u32 1, 7
        %s626 = ssub.s32 1, %s625
        %s627 = scalar_lea.vmem %s598, %s626
        %s628 = ssub.s32 1, %s625
        %s629 = scalar_lea.vmem %s599, %s628 [#allocation2]
        %s630 = sshllo.u32 0, %s625
        loop: start=0, step=1, limit=1
        $region389: #{batch_tree_encoder_forward.3} parent=387 // loop_pre_header
          _
        $region390: #{batch_tree_encoder_forward.3} parent=387 // loop_header
          %s632 = sphi 0, %s636
          %p633 = scmp.ge.s32.totalorder %s632, 1
          %s637 = sphi %s627, %s627
          %s638 = sphi %s629, %s629
        $region391: #{batch_tree_encoder_forward.3} parent=387 // loop_header_branch
          %635 = sbr.rel (%p633) target = $region395
        $region392: #{batch_tree_encoder_forward.3} parent=387 // loop_body
          %v639 = vld [vmem:[%s637] sm:%s630]
          %640 = vst [vmem:[%s638] sm:%s630] %v639
        $region393: #{batch_tree_encoder_forward.3} parent=387 // loop_footer
          %s636 = sadd.s32 1, %s632
        $region394: #{batch_tree_encoder_forward.3} parent=387 // loop_footer_branch
          %631 = sbr.rel target = $region390
        $region395: #{batch_tree_encoder_forward.3} parent=387 // loop_exit
          _
      $region388: #{batch_tree_encoder_forward.3} parent=372 // pred_fallthru
        _
    $region373: #{batch_tree_encoder_forward.3} parent=1 // pred_fallthru
      _
    // Predicated region
    $region374: #{batch_tree_encoder_forward.3} parent=1 // pred_check
      %p606 = pneg %p602
    $region375: #{batch_tree_encoder_forward.3} parent=1 // pred_check_branch
      %608 = sbr.rel (%p606) target = $region377
    $region376: #{batch_tree_encoder_forward.3} parent=1 // pred_region
      %s609 = sshllo.u32 0, 1
      loop: start=0, step=1, limit=1
      $region378: #{batch_tree_encoder_forward.3} parent=376 // loop_pre_header
        _
      $region379: #{batch_tree_encoder_forward.3} parent=376 // loop_header
        %s611 = sphi 0, %s615
        %p612 = scmp.ge.s32.totalorder %s611, 1
        %s616 = sphi %s598, %s598
        %s617 = sphi %s599, %s599
      $region380: #{batch_tree_encoder_forward.3} parent=376 // loop_header_branch
        %614 = sbr.rel (%p612) target = $region384
      $region381: #{batch_tree_encoder_forward.3} parent=376 // loop_body
        %v618 = vld [vmem:[%s616] sm:%s609]
        %619 = vst [vmem:[%s617] sm:%s609] %v618
      $region382: #{batch_tree_encoder_forward.3} parent=376 // loop_footer
        %s615 = sadd.s32 1, %s611
      $region383: #{batch_tree_encoder_forward.3} parent=376 // loop_footer_branch
        %610 = sbr.rel target = $region379
      $region384: #{batch_tree_encoder_forward.3} parent=376 // loop_exit
        _
    $region377: #{batch_tree_encoder_forward.3} parent=1 // pred_fallthru
      _
    // Predicated region
    $region396: #{batch_tree_encoder_forward.3} parent=1 // pred_check
      _
    $region397: #{batch_tree_encoder_forward.3} parent=1 // pred_check_branch
      %643 = sbr.rel (0) target = $region399
    $region398: #{batch_tree_encoder_forward.3} parent=1 // pred_region
      %644 = vsyncadd %s600, 16
    $region399: #{batch_tree_encoder_forward.3} parent=1 // pred_fallthru
      _
    %s645 = sld [smem:[#allocation4 + $0x85]]
    %s646 = scalar_lea.vmem %s1, %s645
    %s647 = scalar_lea.vmem [#allocation2], 13
    %s648 = scalar_lea.sflag [#allocation3], 13
    %p650 = scmp.lt.u32.totalorder 1, 8
    %p651 = pneg %p650
    // Predicated region
    $region400: #{batch_tree_encoder_forward.3} parent=1 // pred_check
      _
    $region401: #{batch_tree_encoder_forward.3} parent=1 // pred_check_branch
      %653 = sbr.rel (%p650) target = $region403
    $region402: #{batch_tree_encoder_forward.3} parent=1 // pred_region
      %s668 = sand.u32 1, 7
      %p669 = scmp.eq.s32.totalorder %s668, 0
      %p670 = pneg %p669
      // Predicated region
      $region415: #{batch_tree_encoder_forward.3} parent=402 // pred_check
        _
      $region416: #{batch_tree_encoder_forward.3} parent=402 // pred_check_branch
        %672 = sbr.rel (%p669) target = $region418
      $region417: #{batch_tree_encoder_forward.3} parent=402 // pred_region
        %s673 = sand.u32 1, 7
        %s674 = ssub.s32 1, %s673
        %s675 = scalar_lea.vmem %s646, %s674
        %s676 = ssub.s32 1, %s673
        %s677 = scalar_lea.vmem %s647, %s676 [#allocation2]
        %s678 = sshllo.u32 0, %s673
        loop: start=0, step=1, limit=1
        $region419: #{batch_tree_encoder_forward.3} parent=417 // loop_pre_header
          _
        $region420: #{batch_tree_encoder_forward.3} parent=417 // loop_header
          %s680 = sphi 0, %s684
          %p681 = scmp.ge.s32.totalorder %s680, 1
          %s685 = sphi %s675, %s675
          %s686 = sphi %s677, %s677
        $region421: #{batch_tree_encoder_forward.3} parent=417 // loop_header_branch
          %683 = sbr.rel (%p681) target = $region425
        $region422: #{batch_tree_encoder_forward.3} parent=417 // loop_body
          %v687 = vld [vmem:[%s685] sm:%s678]
          %688 = vst [vmem:[%s686] sm:%s678] %v687
        $region423: #{batch_tree_encoder_forward.3} parent=417 // loop_footer
          %s684 = sadd.s32 1, %s680
        $region424: #{batch_tree_encoder_forward.3} parent=417 // loop_footer_branch
          %679 = sbr.rel target = $region420
        $region425: #{batch_tree_encoder_forward.3} parent=417 // loop_exit
          _
      $region418: #{batch_tree_encoder_forward.3} parent=402 // pred_fallthru
        _
    $region403: #{batch_tree_encoder_forward.3} parent=1 // pred_fallthru
      _
    // Predicated region
    $region404: #{batch_tree_encoder_forward.3} parent=1 // pred_check
      %p654 = pneg %p650
    $region405: #{batch_tree_encoder_forward.3} parent=1 // pred_check_branch
      %656 = sbr.rel (%p654) target = $region407
    $region406: #{batch_tree_encoder_forward.3} parent=1 // pred_region
      %s657 = sshllo.u32 0, 1
      loop: start=0, step=1, limit=1
      $region408: #{batch_tree_encoder_forward.3} parent=406 // loop_pre_header
        _
      $region409: #{batch_tree_encoder_forward.3} parent=406 // loop_header
        %s659 = sphi 0, %s663
        %p660 = scmp.ge.s32.totalorder %s659, 1
        %s664 = sphi %s646, %s646
        %s665 = sphi %s647, %s647
      $region410: #{batch_tree_encoder_forward.3} parent=406 // loop_header_branch
        %662 = sbr.rel (%p660) target = $region414
      $region411: #{batch_tree_encoder_forward.3} parent=406 // loop_body
        %v666 = vld [vmem:[%s664] sm:%s657]
        %667 = vst [vmem:[%s665] sm:%s657] %v666
      $region412: #{batch_tree_encoder_forward.3} parent=406 // loop_footer
        %s663 = sadd.s32 1, %s659
      $region413: #{batch_tree_encoder_forward.3} parent=406 // loop_footer_branch
        %658 = sbr.rel target = $region409
      $region414: #{batch_tree_encoder_forward.3} parent=406 // loop_exit
        _
    $region407: #{batch_tree_encoder_forward.3} parent=1 // pred_fallthru
      _
    // Predicated region
    $region426: #{batch_tree_encoder_forward.3} parent=1 // pred_check
      _
    $region427: #{batch_tree_encoder_forward.3} parent=1 // pred_check_branch
      %691 = sbr.rel (0) target = $region429
    $region428: #{batch_tree_encoder_forward.3} parent=1 // pred_region
      %692 = vsyncadd %s648, 16
    $region429: #{batch_tree_encoder_forward.3} parent=1 // pred_fallthru
      _
    %s693 = sld [smem:[#allocation4 + $0x86]]
    %s694 = scalar_lea.vmem %s1, %s693
    %s695 = scalar_lea.vmem [#allocation2], 14
    %s696 = scalar_lea.sflag [#allocation3], 14
    %p698 = scmp.lt.u32.totalorder 1, 8
    %p699 = pneg %p698
    // Predicated region
    $region430: #{batch_tree_encoder_forward.3} parent=1 // pred_check
      _
    $region431: #{batch_tree_encoder_forward.3} parent=1 // pred_check_branch
      %701 = sbr.rel (%p698) target = $region433
    $region432: #{batch_tree_encoder_forward.3} parent=1 // pred_region
      %s716 = sand.u32 1, 7
      %p717 = scmp.eq.s32.totalorder %s716, 0
      %p718 = pneg %p717
      // Predicated region
      $region445: #{batch_tree_encoder_forward.3} parent=432 // pred_check
        _
      $region446: #{batch_tree_encoder_forward.3} parent=432 // pred_check_branch
        %720 = sbr.rel (%p717) target = $region448
      $region447: #{batch_tree_encoder_forward.3} parent=432 // pred_region
        %s721 = sand.u32 1, 7
        %s722 = ssub.s32 1, %s721
        %s723 = scalar_lea.vmem %s694, %s722
        %s724 = ssub.s32 1, %s721
        %s725 = scalar_lea.vmem %s695, %s724 [#allocation2]
        %s726 = sshllo.u32 0, %s721
        loop: start=0, step=1, limit=1
        $region449: #{batch_tree_encoder_forward.3} parent=447 // loop_pre_header
          _
        $region450: #{batch_tree_encoder_forward.3} parent=447 // loop_header
          %s728 = sphi 0, %s732
          %p729 = scmp.ge.s32.totalorder %s728, 1
          %s733 = sphi %s723, %s723
          %s734 = sphi %s725, %s725
        $region451: #{batch_tree_encoder_forward.3} parent=447 // loop_header_branch
          %731 = sbr.rel (%p729) target = $region455
        $region452: #{batch_tree_encoder_forward.3} parent=447 // loop_body
          %v735 = vld [vmem:[%s733] sm:%s726]
          %736 = vst [vmem:[%s734] sm:%s726] %v735
        $region453: #{batch_tree_encoder_forward.3} parent=447 // loop_footer
          %s732 = sadd.s32 1, %s728
        $region454: #{batch_tree_encoder_forward.3} parent=447 // loop_footer_branch
          %727 = sbr.rel target = $region450
        $region455: #{batch_tree_encoder_forward.3} parent=447 // loop_exit
          _
      $region448: #{batch_tree_encoder_forward.3} parent=432 // pred_fallthru
        _
    $region433: #{batch_tree_encoder_forward.3} parent=1 // pred_fallthru
      _
    // Predicated region
    $region434: #{batch_tree_encoder_forward.3} parent=1 // pred_check
      %p702 = pneg %p698
    $region435: #{batch_tree_encoder_forward.3} parent=1 // pred_check_branch
      %704 = sbr.rel (%p702) target = $region437
    $region436: #{batch_tree_encoder_forward.3} parent=1 // pred_region
      %s705 = sshllo.u32 0, 1
      loop: start=0, step=1, limit=1
      $region438: #{batch_tree_encoder_forward.3} parent=436 // loop_pre_header
        _
      $region439: #{batch_tree_encoder_forward.3} parent=436 // loop_header
        %s707 = sphi 0, %s711
        %p708 = scmp.ge.s32.totalorder %s707, 1
        %s712 = sphi %s694, %s694
        %s713 = sphi %s695, %s695
      $region440: #{batch_tree_encoder_forward.3} parent=436 // loop_header_branch
        %710 = sbr.rel (%p708) target = $region444
      $region441: #{batch_tree_encoder_forward.3} parent=436 // loop_body
        %v714 = vld [vmem:[%s712] sm:%s705]
        %715 = vst [vmem:[%s713] sm:%s705] %v714
      $region442: #{batch_tree_encoder_forward.3} parent=436 // loop_footer
        %s711 = sadd.s32 1, %s707
      $region443: #{batch_tree_encoder_forward.3} parent=436 // loop_footer_branch
        %706 = sbr.rel target = $region439
      $region444: #{batch_tree_encoder_forward.3} parent=436 // loop_exit
        _
    $region437: #{batch_tree_encoder_forward.3} parent=1 // pred_fallthru
      _
    // Predicated region
    $region456: #{batch_tree_encoder_forward.3} parent=1 // pred_check
      _
    $region457: #{batch_tree_encoder_forward.3} parent=1 // pred_check_branch
      %739 = sbr.rel (0) target = $region459
    $region458: #{batch_tree_encoder_forward.3} parent=1 // pred_region
      %740 = vsyncadd %s696, 16
    $region459: #{batch_tree_encoder_forward.3} parent=1 // pred_fallthru
      _
    %s741 = sld [smem:[#allocation4 + $0x87]]
    %s742 = scalar_lea.vmem %s1, %s741
    %s743 = scalar_lea.vmem [#allocation2], 15
    %s744 = scalar_lea.sflag [#allocation3], 15
    %p746 = scmp.lt.u32.totalorder 1, 8
    %p747 = pneg %p746
    // Predicated region
    $region460: #{batch_tree_encoder_forward.3} parent=1 // pred_check
      _
    $region461: #{batch_tree_encoder_forward.3} parent=1 // pred_check_branch
      %749 = sbr.rel (%p746) target = $region463
    $region462: #{batch_tree_encoder_forward.3} parent=1 // pred_region
      %s764 = sand.u32 1, 7
      %p765 = scmp.eq.s32.totalorder %s764, 0
      %p766 = pneg %p765
      // Predicated region
      $region475: #{batch_tree_encoder_forward.3} parent=462 // pred_check
        _
      $region476: #{batch_tree_encoder_forward.3} parent=462 // pred_check_branch
        %768 = sbr.rel (%p765) target = $region478
      $region477: #{batch_tree_encoder_forward.3} parent=462 // pred_region
        %s769 = sand.u32 1, 7
        %s770 = ssub.s32 1, %s769
        %s771 = scalar_lea.vmem %s742, %s770
        %s772 = ssub.s32 1, %s769
        %s773 = scalar_lea.vmem %s743, %s772 [#allocation2]
        %s774 = sshllo.u32 0, %s769
        loop: start=0, step=1, limit=1
        $region479: #{batch_tree_encoder_forward.3} parent=477 // loop_pre_header
          _
        $region480: #{batch_tree_encoder_forward.3} parent=477 // loop_header
          %s776 = sphi 0, %s780
          %p777 = scmp.ge.s32.totalorder %s776, 1
          %s781 = sphi %s771, %s771
          %s782 = sphi %s773, %s773
        $region481: #{batch_tree_encoder_forward.3} parent=477 // loop_header_branch
          %779 = sbr.rel (%p777) target = $region485
        $region482: #{batch_tree_encoder_forward.3} parent=477 // loop_body
          %v783 = vld [vmem:[%s781] sm:%s774]
          %784 = vst [vmem:[%s782] sm:%s774] %v783
        $region483: #{batch_tree_encoder_forward.3} parent=477 // loop_footer
          %s780 = sadd.s32 1, %s776
        $region484: #{batch_tree_encoder_forward.3} parent=477 // loop_footer_branch
          %775 = sbr.rel target = $region480
        $region485: #{batch_tree_encoder_forward.3} parent=477 // loop_exit
          _
      $region478: #{batch_tree_encoder_forward.3} parent=462 // pred_fallthru
        _
    $region463: #{batch_tree_encoder_forward.3} parent=1 // pred_fallthru
      _
    // Predicated region
    $region464: #{batch_tree_encoder_forward.3} parent=1 // pred_check
      %p750 = pneg %p746
    $region465: #{batch_tree_encoder_forward.3} parent=1 // pred_check_branch
      %752 = sbr.rel (%p750) target = $region467
    $region466: #{batch_tree_encoder_forward.3} parent=1 // pred_region
      %s753 = sshllo.u32 0, 1
      loop: start=0, step=1, limit=1
      $region468: #{batch_tree_encoder_forward.3} parent=466 // loop_pre_header
        _
      $region469: #{batch_tree_encoder_forward.3} parent=466 // loop_header
        %s755 = sphi 0, %s759
        %p756 = scmp.ge.s32.totalorder %s755, 1
        %s760 = sphi %s742, %s742
        %s761 = sphi %s743, %s743
      $region470: #{batch_tree_encoder_forward.3} parent=466 // loop_header_branch
        %758 = sbr.rel (%p756) target = $region474
      $region471: #{batch_tree_encoder_forward.3} parent=466 // loop_body
        %v762 = vld [vmem:[%s760] sm:%s753]
        %763 = vst [vmem:[%s761] sm:%s753] %v762
      $region472: #{batch_tree_encoder_forward.3} parent=466 // loop_footer
        %s759 = sadd.s32 1, %s755
      $region473: #{batch_tree_encoder_forward.3} parent=466 // loop_footer_branch
        %754 = sbr.rel target = $region469
      $region474: #{batch_tree_encoder_forward.3} parent=466 // loop_exit
        _
    $region467: #{batch_tree_encoder_forward.3} parent=1 // pred_fallthru
      _
    // Predicated region
    $region486: #{batch_tree_encoder_forward.3} parent=1 // pred_check
      _
    $region487: #{batch_tree_encoder_forward.3} parent=1 // pred_check_branch
      %787 = sbr.rel (0) target = $region489
    $region488: #{batch_tree_encoder_forward.3} parent=1 // pred_region
      %788 = vsyncadd %s744, 16
    $region489: #{batch_tree_encoder_forward.3} parent=1 // pred_fallthru
      _
    %s789 = smul.u32 1, 1
    %s790 = sshll.u32 %s789, 4
    %791 = dma.done [#allocation3], %s790
    %s792 = sshll.u32 %s789, 4
    %793 = dma.done %s72, %s792
    %s794 = sshll.u32 %s789, 4
    %795 = dma.done %s120, %s794
    %s796 = sshll.u32 %s789, 4
    %797 = dma.done %s168, %s796
    %s798 = sshll.u32 %s789, 4
    %799 = dma.done %s216, %s798
    %s800 = sshll.u32 %s789, 4
    %801 = dma.done %s264, %s800
    %s802 = sshll.u32 %s789, 4
    %803 = dma.done %s312, %s802
    %s804 = sshll.u32 %s789, 4
    %805 = dma.done %s360, %s804
    %s806 = sshll.u32 %s789, 4
    %807 = dma.done %s408, %s806
    %s808 = sshll.u32 %s789, 4
    %809 = dma.done %s456, %s808
    %s810 = sshll.u32 %s789, 4
    %811 = dma.done %s504, %s810
    %s812 = sshll.u32 %s789, 4
    %813 = dma.done %s552, %s812
    %s814 = sshll.u32 %s789, 4
    %815 = dma.done %s600, %s814
    %s816 = sshll.u32 %s789, 4
    %817 = dma.done %s648, %s816
    %s818 = sshll.u32 %s789, 4
    %819 = dma.done %s696, %s818
    %s820 = sshll.u32 %s789, 4
    %821 = dma.done %s744, %s820
    %v822 = vld [vmem:[#allocation2] sm:$0xff]
    %v823 = vld [vmem:[#allocation2 + $0x8] sm:$0xff]
    %v824 = vrot.slane %v822, 4
    %v825 = vmax.f32 %v822, %v824
    %v826 = vrot.slane %v825, 2
    %v827 = vmax.f32 %v825, %v826
    %v828 = vrot.slane %v827, 1
    %v829 = vmax.f32 %v827, %v828
    %v830 = vrot.slane %v823, 4
    %v831 = vmax.f32 %v823, %v830
    %v832 = vrot.slane %v831, 2
    %v833 = vmax.f32 %v831, %v832
    %v834 = vrot.slane %v833, 1
    %v835 = vmax.f32 %v833, %v834
    %vm838 = vcmask 1041409
    %v839 = vsel %vm838, %v835, %v829
    %841 = vst [vmem:[#allocation7] sm:$0x3] %v839
    // Predicated region
    $region490: #{batch_tree_encoder_forward.3} parent=1 // pred_check
      _
    $region491: #{batch_tree_encoder_forward.3} parent=1 // pred_check_branch
      %843 = sbr.rel (0) target = $region493
    $region492: #{batch_tree_encoder_forward.3} parent=1 // pred_region
      %s845 = ssub.s32 32, 32
      %846 = vsyncadd [#allocation5], %s845
      %s848 = sshll.u32 [#allocation7], 4
      %s849 = int_to_ptr.vmem [resolvable:$true] %s848
      %851 = dma.vmem_to_hbm [thread:$0]  %s849, 32, %s2, [#allocation5]
    $region493: #{batch_tree_encoder_forward.3} parent=1 // pred_fallthru
      _
    // Predicated region
    $region494: #{batch_tree_encoder_forward.3} parent=1 // pred_check
      _
    $region495: #{batch_tree_encoder_forward.3} parent=1 // pred_check_branch
      %853 = sbr.rel (0) target = $region497
    $region496: #{batch_tree_encoder_forward.3} parent=1 // pred_region
      %854 = dma.done [#allocation5], 32
    $region497: #{batch_tree_encoder_forward.3} parent=1 // pred_fallthru
      _
    %855 = vsyncpa [#allocation5], 1
    %856 = vsyncpa [#allocation6], 1
  %857 = vsyncmov [#allocation3]
  %s858 = vpop.sfrf %857
  %p859 = scmp.eq.s32.totalorder %s858, 0
  %p860 = pneg %p859
  %862 = shalt.err (%p860)
  %s863 = scalar_lea.sflag [#allocation3], 1
  %864 = vsyncmov %s863
  %s865 = vpop.sfrf %864
  %p866 = scmp.eq.s32.totalorder %s865, 0
  %p867 = pneg %p866
  %869 = shalt.err (%p867)
  %s870 = scalar_lea.sflag [#allocation3], 2
  %871 = vsyncmov %s870
  %s872 = vpop.sfrf %871
  %p873 = scmp.eq.s32.totalorder %s872, 0
  %p874 = pneg %p873
  %876 = shalt.err (%p874)
  %s877 = scalar_lea.sflag [#allocation3], 3
  %878 = vsyncmov %s877
  %s879 = vpop.sfrf %878
  %p880 = scmp.eq.s32.totalorder %s879, 0
  %p881 = pneg %p880
  %883 = shalt.err (%p881)
  %s884 = scalar_lea.sflag [#allocation3], 4
  %885 = vsyncmov %s884
  %s886 = vpop.sfrf %885
  %p887 = scmp.eq.s32.totalorder %s886, 0
  %p888 = pneg %p887
  %890 = shalt.err (%p888)
  %s891 = scalar_lea.sflag [#allocation3], 5
  %892 = vsyncmov %s891
  %s893 = vpop.sfrf %892
  %p894 = scmp.eq.s32.totalorder %s893, 0
  %p895 = pneg %p894
  %897 = shalt.err (%p895)
  %s898 = scalar_lea.sflag [#allocation3], 6
  %899 = vsyncmov %s898
  %s900 = vpop.sfrf %899
  %p901 = scmp.eq.s32.totalorder %s900, 0
  %p902 = pneg %p901
  %904 = shalt.err (%p902)
  %s905 = scalar_lea.sflag [#allocation3], 7
  %906 = vsyncmov %s905
  %s907 = vpop.sfrf %906
  %p908 = scmp.eq.s32.totalorder %s907, 0
  %p909 = pneg %p908
  %911 = shalt.err (%p909)
  %s912 = scalar_lea.sflag [#allocation3], 8
  %913 = vsyncmov %s912
  %s914 = vpop.sfrf %913
  %p915 = scmp.eq.s32.totalorder %s914, 0
  %p916 = pneg %p915
  %918 = shalt.err (%p916)
  %s919 = scalar_lea.sflag [#allocation3], 9
  %920 = vsyncmov %s919
  %s921 = vpop.sfrf %920
  %p922 = scmp.eq.s32.totalorder %s921, 0
  %p923 = pneg %p922
  %925 = shalt.err (%p923)
  %s926 = scalar_lea.sflag [#allocation3], 10
  %927 = vsyncmov %s926
  %s928 = vpop.sfrf %927
  %p929 = scmp.eq.s32.totalorder %s928, 0
  %p930 = pneg %p929
  %932 = shalt.err (%p930)
  %s933 = scalar_lea.sflag [#allocation3], 11
  %934 = vsyncmov %s933
  %s935 = vpop.sfrf %934
  %p936 = scmp.eq.s32.totalorder %s935, 0
  %p937 = pneg %p936
  %939 = shalt.err (%p937)
  %s940 = scalar_lea.sflag [#allocation3], 12
  %941 = vsyncmov %s940
  %s942 = vpop.sfrf %941
  %p943 = scmp.eq.s32.totalorder %s942, 0
  %p944 = pneg %p943
  %946 = shalt.err (%p944)
  %s947 = scalar_lea.sflag [#allocation3], 13
  %948 = vsyncmov %s947
  %s949 = vpop.sfrf %948
  %p950 = scmp.eq.s32.totalorder %s949, 0
  %p951 = pneg %p950
  %953 = shalt.err (%p951)
  %s954 = scalar_lea.sflag [#allocation3], 14
  %955 = vsyncmov %s954
  %s956 = vpop.sfrf %955
  %p957 = scmp.eq.s32.totalorder %s956, 0
  %p958 = pneg %p957
  %960 = shalt.err (%p958)
  %s961 = scalar_lea.sflag [#allocation3], 15
  %962 = vsyncmov %s961
  %s963 = vpop.sfrf %962
  %p964 = scmp.eq.s32.totalorder %s963, 0
  %p965 = pneg %p964
  %967 = shalt.err (%p965)

</llo_original>
